<compile_context>
chip_gen: v7x
topology: tpu7x:2x2x1
jax: 0.10.0
libtpu: 0.0.40
codegen_flags: <defaults>
</compile_context>

<pallas_src>
import functools

import jax
import jax.numpy as jnp
from jax.experimental import pallas as pl
from jax.experimental.pallas import tpu as pltpu


# ----------------------------------------------------------------------------
# Fused forward kernel
# ----------------------------------------------------------------------------

def _fused_forward_kernel(*refs, T, B, H, L):
    """Whole Day_Model_1 forward in one kernel invocation (no grid).

    Ref layout (inputs, outputs, scratch):
      inputs : x (T*B, F) time-major, fc_in_w (F, H), fc_in_b (1, H),
               [wih_l (H, 4H), whh_l (H, 4H), b_l (1, 4H)] * L,
               fc_final_w (1, H), fc_final_b (1, 1)
      outputs: fc_hid (T*B, H) time-major, out (B, 1)
      scratch: seq_sc (T*B, H) f32 -- per-layer output sequence, VMEM resident
    """
    x_ref, w_in_ref, b_in_ref = refs[0:3]
    layer_refs = refs[3:3 + 3 * L]
    w_fin_ref, b_fin_ref = refs[3 + 3 * L:5 + 3 * L]
    fc_hid_ref, out_ref = refs[5 + 3 * L:7 + 3 * L]
    seq_sc = refs[7 + 3 * L]

    # fc_in + tanh over ALL timesteps at once (one MXU matmul).
    fc = jnp.tanh(
        jnp.dot(x_ref[...], w_in_ref[...], preferred_element_type=jnp.float32)
        + b_in_ref[...])
    fc_hid_ref[...] = fc.astype(fc_hid_ref.dtype)

    def lstm_layer(seq_in, wih_ref, whh_ref, b_ref):
        # Hoisted input projection for all T timesteps (off the serial chain).
        xp = (jnp.dot(seq_in, wih_ref[...], preferred_element_type=jnp.float32)
              + b_ref[...])                                   # (T*B, 4H)
        whh = whh_ref[...]
        h = jnp.zeros((B, H), jnp.float32)
        c = jnp.zeros((B, H), jnp.float32)
        for t in range(T):  # fully unrolled; only h @ W_hh is recurrent
            gates = xp[t * B:(t + 1) * B, :] + jnp.dot(
                h, whh, preferred_element_type=jnp.float32)   # (B, 4H)
            i_g = jax.nn.sigmoid(gates[:, 0:H])               # PyTorch order:
            f_g = jax.nn.sigmoid(gates[:, H:2 * H])           # i, f, g, o
            g_g = jnp.tanh(gates[:, 2 * H:3 * H])
            o_g = jax.nn.sigmoid(gates[:, 3 * H:4 * H])
            c = f_g * c + i_g * g_g
            h = o_g * jnp.tanh(c)
            seq_sc[t * B:(t + 1) * B, :] = h                  # stays in VMEM
        return h

    seq = fc
    h_last = None
    for l in range(L):
        wih_ref, whh_ref, b_ref = layer_refs[3 * l:3 * l + 3]
        h_last = lstm_layer(seq, wih_ref, whh_ref, b_ref)
        seq = seq_sc[...]   # full layer output sequence for the next layer

    # fc_final on the last timestep: VPU multiply + lane reduction
    # (output width 1 -> avoid a fully lane-masked MXU matmul).
    out = (jnp.sum(h_last * w_fin_ref[...], axis=-1, keepdims=True)
           + b_fin_ref[...])
    out_ref[...] = out.astype(out_ref.dtype)


def _fused_forward_pallas(x_tbf, params, *, T, B, H, L):
    inputs = [x_tbf, params["fc_in_w"], params["fc_in_b"].reshape(1, -1)]
    for l in range(L):
        inputs += [params[f"wih{l}"], params[f"whh{l}"],
                   params[f"b{l}"].reshape(1, -1)]
    inputs += [params["fc_final_w"].reshape(1, -1),
               params["fc_final_b"].reshape(1, 1)]

    kernel = functools.partial(_fused_forward_kernel, T=T, B=B, H=H, L=L)
    vmem = pltpu.MemorySpace.VMEM
    fc_hid_flat, out = pl.pallas_call(
        kernel,
        out_shape=(jax.ShapeDtypeStruct((T * B, H), jnp.float32),
                   jax.ShapeDtypeStruct((B, 1), jnp.float32)),
        in_specs=[pl.BlockSpec(memory_space=vmem)] * len(inputs),
        out_specs=(pl.BlockSpec(memory_space=vmem),
                   pl.BlockSpec(memory_space=vmem)),
        scratch_shapes=[pltpu.VMEM((T * B, H), jnp.float32)],
    )(*inputs)
    return fc_hid_flat, out


# ----------------------------------------------------------------------------
# Model: parameter init + forward
# ----------------------------------------------------------------------------

def init_params(key, input_size, hid_size, rnn_layer):
    keys = jax.random.split(key, 4 + 3 * rnn_layer)
    scale = 0.1
    params = {
        "fc_in_w": scale * jax.random.normal(keys[0], (input_size, hid_size), jnp.float32),
        "fc_in_b": scale * jax.random.normal(keys[1], (hid_size,), jnp.float32),
        "fc_final_w": scale * jax.random.normal(keys[2], (hid_size, 1), jnp.float32),
        "fc_final_b": scale * jax.random.normal(keys[3], (1,), jnp.float32),
    }
    for l in range(rnn_layer):
        k = keys[4 + 3 * l: 7 + 3 * l]
        # stored transposed w.r.t. PyTorch: (in, 4H); b = b_ih + b_hh combined
        params[f"wih{l}"] = scale * jax.random.normal(k[0], (hid_size, 4 * hid_size), jnp.float32)
        params[f"whh{l}"] = scale * jax.random.normal(k[1], (hid_size, 4 * hid_size), jnp.float32)
        params[f"b{l}"] = scale * jax.random.normal(k[2], (4 * hid_size,), jnp.float32)
    return params


@functools.partial(jax.jit, static_argnames=("input_size", "input_day", "rnn_layer"))
def day_model_1_forward(x, params, *, input_size, input_day, rnn_layer):
    x = x.reshape(-1, input_size, input_day)            # view(-1, F, T)
    B = x.shape[0]
    T = input_day
    H = params["fc_in_w"].shape[1]

    # time-major flattened input: row (t*B + b) <- x[b, :, t]
    x_tbf = jnp.transpose(x, (2, 0, 1)).reshape(T * B, input_size)

    fc_hid_flat, out = _fused_forward_pallas(
        x_tbf, params, T=T, B=B, H=H, L=rnn_layer)

    fc_hid = jnp.transpose(fc_hid_flat.reshape(T, B, H), (1, 0, 2))  # (B, T, H)
    return fc_hid, out[:, 0]


# ----------------------------------------------------------------------------
# Pure-JAX reference (for correctness check)
# ----------------------------------------------------------------------------

def _reference_forward(x, params, *, input_size, input_day, rnn_layer):
    B = x.shape[0]
    x = x.reshape(B, input_size, input_day).transpose(0, 2, 1)       # (B, T, F)
    fc_hid = jnp.tanh(x @ params["fc_in_w"] + params["fc_in_b"])     # (B, T, H)
    H = params["fc_in_w"].shape[1]

    seq = jnp.transpose(fc_hid, (1, 0, 2))                           # (T, B, H)
    for l in range(rnn_layer):
        wih, whh, b = params[f"wih{l}"], params[f"whh{l}"], params[f"b{l}"]

        def step(carry, x_t):
            h, c = carry
            gates = x_t @ wih + h @ whh + b
            i = jax.nn.sigmoid(gates[:, 0:H])
            f = jax.nn.sigmoid(gates[:, H:2 * H])
            g = jnp.tanh(gates[:, 2 * H:3 * H])
            o = jax.nn.sigmoid(gates[:, 3 * H:4 * H])
            c = f * c + i * g
            h = o * jnp.tanh(c)
            return (h, c), h

        init = (jnp.zeros((B, H), jnp.float32), jnp.zeros((B, H), jnp.float32))
        _, seq = jax.lax.scan(step, init, seq)
    last = seq[-1]
    out = (last @ params["fc_final_w"] + params["fc_final_b"])[:, 0]
    return fc_hid, out


# ----------------------------------------------------------------------------
# Main
# ----------------------------------------------------------------------------

if __name__ == "__main__":
    # small shapes consistent with the module: input_shape = (input_size, _, input_day)
    B, INPUT_SIZE, INPUT_DAY, HID, RNN_LAYER = 2, 16, 8, 32, 2

    key = jax.random.PRNGKey(0)
    k_x, k_p = jax.random.split(key)
    x = jax.random.normal(k_x, (B, INPUT_SIZE, INPUT_DAY), jnp.float32)
    params = init_params(k_p, INPUT_SIZE, HID, RNN_LAYER)

    fc_hid, out_seq = day_model_1_forward(
        x, params, input_size=INPUT_SIZE, input_day=INPUT_DAY, rnn_layer=RNN_LAYER)
    jax.block_until_ready((fc_hid, out_seq))

    ref_hid, ref_out = _reference_forward(
        x, params, input_size=INPUT_SIZE, input_day=INPUT_DAY, rnn_layer=RNN_LAYER)

    assert fc_hid.shape == (B, INPUT_DAY, HID), fc_hid.shape
    assert out_seq.shape == (B,), out_seq.shape
    assert jnp.allclose(fc_hid, ref_hid, atol=2e-3, rtol=2e-3)
    assert jnp.allclose(out_seq, ref_out, atol=2e-3, rtol=2e-3)

    print("KERNEL_OK")
</pallas_src>

<mosaic_0001>
module attributes {stable_mosaic.version = 11 : i64} {
  func.func @_fused_forward_kernel(%arg0: memref<16x16xf32, #tpu.memory_space<vmem>>, %arg1: memref<16x32xf32, #tpu.memory_space<vmem>>, %arg2: memref<1x32xf32, #tpu.memory_space<vmem>>, %arg3: memref<32x128xf32, #tpu.memory_space<vmem>>, %arg4: memref<32x128xf32, #tpu.memory_space<vmem>>, %arg5: memref<1x128xf32, #tpu.memory_space<vmem>>, %arg6: memref<32x128xf32, #tpu.memory_space<vmem>>, %arg7: memref<32x128xf32, #tpu.memory_space<vmem>>, %arg8: memref<1x128xf32, #tpu.memory_space<vmem>>, %arg9: memref<1x32xf32, #tpu.memory_space<vmem>>, %arg10: memref<1x1xf32, #tpu.memory_space<vmem>>, %arg11: memref<16x32xf32, #tpu.memory_space<vmem>>, %arg12: memref<2x1xf32, #tpu.memory_space<vmem>>, %arg13: memref<16x32xf32, #tpu.memory_space<vmem>>) attributes {dimension_semantics = [], scalar_prefetch = 0 : i64, scratch_operands = 1 : i64, tpu.core_type = #tpu.core_type<tc>} {
    %c0 = arith.constant 0 : index
    %c0_0 = arith.constant 0 : index
    %0 = vector.load %arg0[%c0, %c0_0] : memref<16x16xf32, #tpu.memory_space<vmem>>, vector<16x16xf32>
    %c0_1 = arith.constant 0 : index
    %c0_2 = arith.constant 0 : index
    %1 = vector.load %arg1[%c0_1, %c0_2] : memref<16x32xf32, #tpu.memory_space<vmem>>, vector<16x32xf32>
    %cst = arith.constant dense<0.000000e+00> : vector<16x32xf32>
    %2 = tpu.matmul %0, %1, %cst {dimension_numbers = #tpu.dot_dimension_numbers<[1], [0], [0], [1], [0, 0, 1, 1], [], []>} : vector<16x16xf32>, vector<16x32xf32>, vector<16x32xf32> -> vector<16x32xf32>
    %c0_3 = arith.constant 0 : index
    %c0_4 = arith.constant 0 : index
    %3 = vector.load %arg2[%c0_3, %c0_4] : memref<1x32xf32, #tpu.memory_space<vmem>>, vector<1x32xf32>
    %4 = vector.broadcast %3 : vector<1x32xf32> to vector<16x32xf32>
    %5 = arith.addf %2, %4 : vector<16x32xf32>
    %6 = math.tanh %5 : vector<16x32xf32>
    %c0_5 = arith.constant 0 : index
    %c0_6 = arith.constant 0 : index
    %7 = vector.load %arg11[%c0_5, %c0_6] : memref<16x32xf32, #tpu.memory_space<vmem>>, vector<16x32xf32>
    tpu.vector_store %arg11[%c0_5, %c0_6], %6 {strides = array<i32>} : memref<16x32xf32, #tpu.memory_space<vmem>>, vector<16x32xf32>,
    %c0_7 = arith.constant 0 : index
    %c0_8 = arith.constant 0 : index
    %8 = vector.load %arg3[%c0_7, %c0_8] : memref<32x128xf32, #tpu.memory_space<vmem>>, vector<32x128xf32>
    %cst_9 = arith.constant dense<0.000000e+00> : vector<16x128xf32>
    %9 = tpu.matmul %6, %8, %cst_9 {dimension_numbers = #tpu.dot_dimension_numbers<[1], [0], [0], [1], [0, 0, 1, 1], [], []>} : vector<16x32xf32>, vector<32x128xf32>, vector<16x128xf32> -> vector<16x128xf32>
    %c0_10 = arith.constant 0 : index
    %c0_11 = arith.constant 0 : index
    %10 = vector.load %arg5[%c0_10, %c0_11] : memref<1x128xf32, #tpu.memory_space<vmem>>, vector<1x128xf32>
    %11 = vector.broadcast %10 : vector<1x128xf32> to vector<16x128xf32>
    %12 = arith.addf %9, %11 : vector<16x128xf32>
    %c0_12 = arith.constant 0 : index
    %c0_13 = arith.constant 0 : index
    %13 = vector.load %arg4[%c0_12, %c0_13] : memref<32x128xf32, #tpu.memory_space<vmem>>, vector<32x128xf32>
    %cst_14 = arith.constant 0.000000e+00 : f32
    %14 = vector.broadcast %cst_14 : f32 to vector<2x32xf32>
    %cst_15 = arith.constant 0.000000e+00 : f32
    %15 = vector.broadcast %cst_15 : f32 to vector<2x32xf32>
    %16 = vector.extract_strided_slice %12 {offsets = [0, 0], sizes = [2, 128], strides = [1, 1]} : vector<16x128xf32> to vector<2x128xf32>
    %cst_16 = arith.constant dense<0.000000e+00> : vector<2x128xf32>
    %17 = tpu.matmul %14, %13, %cst_16 {dimension_numbers = #tpu.dot_dimension_numbers<[1], [0], [0], [1], [0, 0, 1, 1], [], []>} : vector<2x32xf32>, vector<32x128xf32>, vector<2x128xf32> -> vector<2x128xf32>
    %18 = arith.addf %16, %17 : vector<2x128xf32>
    %19 = vector.extract_strided_slice %18 {offsets = [0, 0], sizes = [2, 32], strides = [1, 1]} : vector<2x128xf32> to vector<2x32xf32>
    %20 = arith.negf %19 : vector<2x32xf32>
    %21 = math.exp %20 : vector<2x32xf32>
    %cst_17 = arith.constant 1.000000e+00 : f32
    %22 = vector.broadcast %cst_17 : f32 to vector<2x32xf32>
    %23 = arith.addf %22, %21 : vector<2x32xf32>
    %24 = arith.divf %22, %23 : vector<2x32xf32>
    %25 = vector.extract_strided_slice %18 {offsets = [0, 32], sizes = [2, 32], strides = [1, 1]} : vector<2x128xf32> to vector<2x32xf32>
    %26 = arith.negf %25 : vector<2x32xf32>
    %27 = math.exp %26 : vector<2x32xf32>
    %cst_18 = arith.constant 1.000000e+00 : f32
    %28 = vector.broadcast %cst_18 : f32 to vector<2x32xf32>
    %29 = arith.addf %28, %27 : vector<2x32xf32>
    %30 = arith.divf %28, %29 : vector<2x32xf32>
    %31 = vector.extract_strided_slice %18 {offsets = [0, 64], sizes = [2, 32], strides = [1, 1]} : vector<2x128xf32> to vector<2x32xf32>
    %32 = math.tanh %31 : vector<2x32xf32>
    %33 = vector.extract_strided_slice %18 {offsets = [0, 96], sizes = [2, 32], strides = [1, 1]} : vector<2x128xf32> to vector<2x32xf32>
    %34 = arith.negf %33 : vector<2x32xf32>
    %35 = math.exp %34 : vector<2x32xf32>
    %cst_19 = arith.constant 1.000000e+00 : f32
    %36 = vector.broadcast %cst_19 : f32 to vector<2x32xf32>
    %37 = arith.addf %36, %35 : vector<2x32xf32>
    %38 = arith.divf %36, %37 : vector<2x32xf32>
    %39 = arith.mulf %30, %15 : vector<2x32xf32>
    %40 = arith.mulf %24, %32 : vector<2x32xf32>
    %41 = arith.addf %39, %40 : vector<2x32xf32>
    %42 = math.tanh %41 : vector<2x32xf32>
    %43 = arith.mulf %38, %42 : vector<2x32xf32>
    %c0_20 = arith.constant 0 : index
    %c0_21 = arith.constant 0 : index
    %44 = vector.load %arg13[%c0_20, %c0_21] : memref<16x32xf32, #tpu.memory_space<vmem>>, vector<2x32xf32>
    tpu.vector_store %arg13[%c0_20, %c0_21], %43 {strides = array<i32>} : memref<16x32xf32, #tpu.memory_space<vmem>>, vector<2x32xf32>,
    %45 = vector.extract_strided_slice %12 {offsets = [2, 0], sizes = [2, 128], strides = [1, 1]} : vector<16x128xf32> to vector<2x128xf32>
    %cst_22 = arith.constant dense<0.000000e+00> : vector<2x128xf32>
    %46 = tpu.matmul %43, %13, %cst_22 {dimension_numbers = #tpu.dot_dimension_numbers<[1], [0], [0], [1], [0, 0, 1, 1], [], []>} : vector<2x32xf32>, vector<32x128xf32>, vector<2x128xf32> -> vector<2x128xf32>
    %47 = arith.addf %45, %46 : vector<2x128xf32>
    %48 = vector.extract_strided_slice %47 {offsets = [0, 0], sizes = [2, 32], strides = [1, 1]} : vector<2x128xf32> to vector<2x32xf32>
    %49 = arith.negf %48 : vector<2x32xf32>
    %50 = math.exp %49 : vector<2x32xf32>
    %cst_23 = arith.constant 1.000000e+00 : f32
    %51 = vector.broadcast %cst_23 : f32 to vector<2x32xf32>
    %52 = arith.addf %51, %50 : vector<2x32xf32>
    %53 = arith.divf %51, %52 : vector<2x32xf32>
    %54 = vector.extract_strided_slice %47 {offsets = [0, 32], sizes = [2, 32], strides = [1, 1]} : vector<2x128xf32> to vector<2x32xf32>
    %55 = arith.negf %54 : vector<2x32xf32>
    %56 = math.exp %55 : vector<2x32xf32>
    %cst_24 = arith.constant 1.000000e+00 : f32
    %57 = vector.broadcast %cst_24 : f32 to vector<2x32xf32>
    %58 = arith.addf %57, %56 : vector<2x32xf32>
    %59 = arith.divf %57, %58 : vector<2x32xf32>
    %60 = vector.extract_strided_slice %47 {offsets = [0, 64], sizes = [2, 32], strides = [1, 1]} : vector<2x128xf32> to vector<2x32xf32>
    %61 = math.tanh %60 : vector<2x32xf32>
    %62 = vector.extract_strided_slice %47 {offsets = [0, 96], sizes = [2, 32], strides = [1, 1]} : vector<2x128xf32> to vector<2x32xf32>
    %63 = arith.negf %62 : vector<2x32xf32>
    %64 = math.exp %63 : vector<2x32xf32>
    %cst_25 = arith.constant 1.000000e+00 : f32
    %65 = vector.broadcast %cst_25 : f32 to vector<2x32xf32>
    %66 = arith.addf %65, %64 : vector<2x32xf32>
    %67 = arith.divf %65, %66 : vector<2x32xf32>
    %68 = arith.mulf %59, %41 : vector<2x32xf32>
    %69 = arith.mulf %53, %61 : vector<2x32xf32>
    %70 = arith.addf %68, %69 : vector<2x32xf32>
    %71 = math.tanh %70 : vector<2x32xf32>
    %72 = arith.mulf %67, %71 : vector<2x32xf32>
    %c2 = arith.constant 2 : index
    %c0_26 = arith.constant 0 : index
    %73 = vector.load %arg13[%c2, %c0_26] : memref<16x32xf32, #tpu.memory_space<vmem>>, vector<2x32xf32>
    tpu.vector_store %arg13[%c2, %c0_26], %72 {strides = array<i32>} : memref<16x32xf32, #tpu.memory_space<vmem>>, vector<2x32xf32>,
    %74 = vector.extract_strided_slice %12 {offsets = [4, 0], sizes = [2, 128], strides = [1, 1]} : vector<16x128xf32> to vector<2x128xf32>
    %cst_27 = arith.constant dense<0.000000e+00> : vector<2x128xf32>
    %75 = tpu.matmul %72, %13, %cst_27 {dimension_numbers = #tpu.dot_dimension_numbers<[1], [0], [0], [1], [0, 0, 1, 1], [], []>} : vector<2x32xf32>, vector<32x128xf32>, vector<2x128xf32> -> vector<2x128xf32>
    %76 = arith.addf %74, %75 : vector<2x128xf32>
    %77 = vector.extract_strided_slice %76 {offsets = [0, 0], sizes = [2, 32], strides = [1, 1]} : vector<2x128xf32> to vector<2x32xf32>
    %78 = arith.negf %77 : vector<2x32xf32>
    %79 = math.exp %78 : vector<2x32xf32>
    %cst_28 = arith.constant 1.000000e+00 : f32
    %80 = vector.broadcast %cst_28 : f32 to vector<2x32xf32>
    %81 = arith.addf %80, %79 : vector<2x32xf32>
    %82 = arith.divf %80, %81 : vector<2x32xf32>
    %83 = vector.extract_strided_slice %76 {offsets = [0, 32], sizes = [2, 32], strides = [1, 1]} : vector<2x128xf32> to vector<2x32xf32>
    %84 = arith.negf %83 : vector<2x32xf32>
    %85 = math.exp %84 : vector<2x32xf32>
    %cst_29 = arith.constant 1.000000e+00 : f32
    %86 = vector.broadcast %cst_29 : f32 to vector<2x32xf32>
    %87 = arith.addf %86, %85 : vector<2x32xf32>
    %88 = arith.divf %86, %87 : vector<2x32xf32>
    %89 = vector.extract_strided_slice %76 {offsets = [0, 64], sizes = [2, 32], strides = [1, 1]} : vector<2x128xf32> to vector<2x32xf32>
    %90 = math.tanh %89 : vector<2x32xf32>
    %91 = vector.extract_strided_slice %76 {offsets = [0, 96], sizes = [2, 32], strides = [1, 1]} : vector<2x128xf32> to vector<2x32xf32>
    %92 = arith.negf %91 : vector<2x32xf32>
    %93 = math.exp %92 : vector<2x32xf32>
    %cst_30 = arith.constant 1.000000e+00 : f32
    %94 = vector.broadcast %cst_30 : f32 to vector<2x32xf32>
    %95 = arith.addf %94, %93 : vector<2x32xf32>
    %96 = arith.divf %94, %95 : vector<2x32xf32>
    %97 = arith.mulf %88, %70 : vector<2x32xf32>
    %98 = arith.mulf %82, %90 : vector<2x32xf32>
    %99 = arith.addf %97, %98 : vector<2x32xf32>
    %100 = math.tanh %99 : vector<2x32xf32>
    %101 = arith.mulf %96, %100 : vector<2x32xf32>
    %c4 = arith.constant 4 : index
    %c0_31 = arith.constant 0 : index
    %102 = vector.load %arg13[%c4, %c0_31] : memref<16x32xf32, #tpu.memory_space<vmem>>, vector<2x32xf32>
    tpu.vector_store %arg13[%c4, %c0_31], %101 {strides = array<i32>} : memref<16x32xf32, #tpu.memory_space<vmem>>, vector<2x32xf32>,
    %103 = vector.extract_strided_slice %12 {offsets = [6, 0], sizes = [2, 128], strides = [1, 1]} : vector<16x128xf32> to vector<2x128xf32>
    %cst_32 = arith.constant dense<0.000000e+00> : vector<2x128xf32>
    %104 = tpu.matmul %101, %13, %cst_32 {dimension_numbers = #tpu.dot_dimension_numbers<[1], [0], [0], [1], [0, 0, 1, 1], [], []>} : vector<2x32xf32>, vector<32x128xf32>, vector<2x128xf32> -> vector<2x128xf32>
    %105 = arith.addf %103, %104 : vector<2x128xf32>
    %106 = vector.extract_strided_slice %105 {offsets = [0, 0], sizes = [2, 32], strides = [1, 1]} : vector<2x128xf32> to vector<2x32xf32>
    %107 = arith.negf %106 : vector<2x32xf32>
    %108 = math.exp %107 : vector<2x32xf32>
    %cst_33 = arith.constant 1.000000e+00 : f32
    %109 = vector.broadcast %cst_33 : f32 to vector<2x32xf32>
    %110 = arith.addf %109, %108 : vector<2x32xf32>
    %111 = arith.divf %109, %110 : vector<2x32xf32>
    %112 = vector.extract_strided_slice %105 {offsets = [0, 32], sizes = [2, 32], strides = [1, 1]} : vector<2x128xf32> to vector<2x32xf32>
    %113 = arith.negf %112 : vector<2x32xf32>
    %114 = math.exp %113 : vector<2x32xf32>
    %cst_34 = arith.constant 1.000000e+00 : f32
    %115 = vector.broadcast %cst_34 : f32 to vector<2x32xf32>
    %116 = arith.addf %115, %114 : vector<2x32xf32>
    %117 = arith.divf %115, %116 : vector<2x32xf32>
    %118 = vector.extract_strided_slice %105 {offsets = [0, 64], sizes = [2, 32], strides = [1, 1]} : vector<2x128xf32> to vector<2x32xf32>
    %119 = math.tanh %118 : vector<2x32xf32>
    %120 = vector.extract_strided_slice %105 {offsets = [0, 96], sizes = [2, 32], strides = [1, 1]} : vector<2x128xf32> to vector<2x32xf32>
    %121 = arith.negf %120 : vector<2x32xf32>
    %122 = math.exp %121 : vector<2x32xf32>
    %cst_35 = arith.constant 1.000000e+00 : f32
    %123 = vector.broadcast %cst_35 : f32 to vector<2x32xf32>
    %124 = arith.addf %123, %122 : vector<2x32xf32>
    %125 = arith.divf %123, %124 : vector<2x32xf32>
    %126 = arith.mulf %117, %99 : vector<2x32xf32>
    %127 = arith.mulf %111, %119 : vector<2x32xf32>
    %128 = arith.addf %126, %127 : vector<2x32xf32>
    %129 = math.tanh %128 : vector<2x32xf32>
    %130 = arith.mulf %125, %129 : vector<2x32xf32>
    %c6 = arith.constant 6 : index
    %c0_36 = arith.constant 0 : index
    %131 = vector.load %arg13[%c6, %c0_36] : memref<16x32xf32, #tpu.memory_space<vmem>>, vector<2x32xf32>
    tpu.vector_store %arg13[%c6, %c0_36], %130 {strides = array<i32>} : memref<16x32xf32, #tpu.memory_space<vmem>>, vector<2x32xf32>,
    %132 = vector.extract_strided_slice %12 {offsets = [8, 0], sizes = [2, 128], strides = [1, 1]} : vector<16x128xf32> to vector<2x128xf32>
    %cst_37 = arith.constant dense<0.000000e+00> : vector<2x128xf32>
    %133 = tpu.matmul %130, %13, %cst_37 {dimension_numbers = #tpu.dot_dimension_numbers<[1], [0], [0], [1], [0, 0, 1, 1], [], []>} : vector<2x32xf32>, vector<32x128xf32>, vector<2x128xf32> -> vector<2x128xf32>
    %134 = arith.addf %132, %133 : vector<2x128xf32>
    %135 = vector.extract_strided_slice %134 {offsets = [0, 0], sizes = [2, 32], strides = [1, 1]} : vector<2x128xf32> to vector<2x32xf32>
    %136 = arith.negf %135 : vector<2x32xf32>
    %137 = math.exp %136 : vector<2x32xf32>
    %cst_38 = arith.constant 1.000000e+00 : f32
    %138 = vector.broadcast %cst_38 : f32 to vector<2x32xf32>
    %139 = arith.addf %138, %137 : vector<2x32xf32>
    %140 = arith.divf %138, %139 : vector<2x32xf32>
    %141 = vector.extract_strided_slice %134 {offsets = [0, 32], sizes = [2, 32], strides = [1, 1]} : vector<2x128xf32> to vector<2x32xf32>
    %142 = arith.negf %141 : vector<2x32xf32>
    %143 = math.exp %142 : vector<2x32xf32>
    %cst_39 = arith.constant 1.000000e+00 : f32
    %144 = vector.broadcast %cst_39 : f32 to vector<2x32xf32>
    %145 = arith.addf %144, %143 : vector<2x32xf32>
    %146 = arith.divf %144, %145 : vector<2x32xf32>
    %147 = vector.extract_strided_slice %134 {offsets = [0, 64], sizes = [2, 32], strides = [1, 1]} : vector<2x128xf32> to vector<2x32xf32>
    %148 = math.tanh %147 : vector<2x32xf32>
    %149 = vector.extract_strided_slice %134 {offsets = [0, 96], sizes = [2, 32], strides = [1, 1]} : vector<2x128xf32> to vector<2x32xf32>
    %150 = arith.negf %149 : vector<2x32xf32>
    %151 = math.exp %150 : vector<2x32xf32>
    %cst_40 = arith.constant 1.000000e+00 : f32
    %152 = vector.broadcast %cst_40 : f32 to vector<2x32xf32>
    %153 = arith.addf %152, %151 : vector<2x32xf32>
    %154 = arith.divf %152, %153 : vector<2x32xf32>
    %155 = arith.mulf %146, %128 : vector<2x32xf32>
    %156 = arith.mulf %140, %148 : vector<2x32xf32>
    %157 = arith.addf %155, %156 : vector<2x32xf32>
    %158 = math.tanh %157 : vector<2x32xf32>
    %159 = arith.mulf %154, %158 : vector<2x32xf32>
    %c8 = arith.constant 8 : index
    %c0_41 = arith.constant 0 : index
    %160 = vector.load %arg13[%c8, %c0_41] : memref<16x32xf32, #tpu.memory_space<vmem>>, vector<2x32xf32>
    tpu.vector_store %arg13[%c8, %c0_41], %159 {strides = array<i32>} : memref<16x32xf32, #tpu.memory_space<vmem>>, vector<2x32xf32>,
    %161 = vector.extract_strided_slice %12 {offsets = [10, 0], sizes = [2, 128], strides = [1, 1]} : vector<16x128xf32> to vector<2x128xf32>
    %cst_42 = arith.constant dense<0.000000e+00> : vector<2x128xf32>
    %162 = tpu.matmul %159, %13, %cst_42 {dimension_numbers = #tpu.dot_dimension_numbers<[1], [0], [0], [1], [0, 0, 1, 1], [], []>} : vector<2x32xf32>, vector<32x128xf32>, vector<2x128xf32> -> vector<2x128xf32>
    %163 = arith.addf %161, %162 : vector<2x128xf32>
    %164 = vector.extract_strided_slice %163 {offsets = [0, 0], sizes = [2, 32], strides = [1, 1]} : vector<2x128xf32> to vector<2x32xf32>
    %165 = arith.negf %164 : vector<2x32xf32>
    %166 = math.exp %165 : vector<2x32xf32>
    %cst_43 = arith.constant 1.000000e+00 : f32
    %167 = vector.broadcast %cst_43 : f32 to vector<2x32xf32>
    %168 = arith.addf %167, %166 : vector<2x32xf32>
    %169 = arith.divf %167, %168 : vector<2x32xf32>
    %170 = vector.extract_strided_slice %163 {offsets = [0, 32], sizes = [2, 32], strides = [1, 1]} : vector<2x128xf32> to vector<2x32xf32>
    %171 = arith.negf %170 : vector<2x32xf32>
    %172 = math.exp %171 : vector<2x32xf32>
    %cst_44 = arith.constant 1.000000e+00 : f32
    %173 = vector.broadcast %cst_44 : f32 to vector<2x32xf32>
    %174 = arith.addf %173, %172 : vector<2x32xf32>
    %175 = arith.divf %173, %174 : vector<2x32xf32>
    %176 = vector.extract_strided_slice %163 {offsets = [0, 64], sizes = [2, 32], strides = [1, 1]} : vector<2x128xf32> to vector<2x32xf32>
    %177 = math.tanh %176 : vector<2x32xf32>
    %178 = vector.extract_strided_slice %163 {offsets = [0, 96], sizes = [2, 32], strides = [1, 1]} : vector<2x128xf32> to vector<2x32xf32>
    %179 = arith.negf %178 : vector<2x32xf32>
    %180 = math.exp %179 : vector<2x32xf32>
    %cst_45 = arith.constant 1.000000e+00 : f32
    %181 = vector.broadcast %cst_45 : f32 to vector<2x32xf32>
    %182 = arith.addf %181, %180 : vector<2x32xf32>
    %183 = arith.divf %181, %182 : vector<2x32xf32>
    %184 = arith.mulf %175, %157 : vector<2x32xf32>
    %185 = arith.mulf %169, %177 : vector<2x32xf32>
    %186 = arith.addf %184, %185 : vector<2x32xf32>
    %187 = math.tanh %186 : vector<2x32xf32>
    %188 = arith.mulf %183, %187 : vector<2x32xf32>
    %c10 = arith.constant 10 : index
    %c0_46 = arith.constant 0 : index
    %189 = vector.load %arg13[%c10, %c0_46] : memref<16x32xf32, #tpu.memory_space<vmem>>, vector<2x32xf32>
    tpu.vector_store %arg13[%c10, %c0_46], %188 {strides = array<i32>} : memref<16x32xf32, #tpu.memory_space<vmem>>, vector<2x32xf32>,
    %190 = vector.extract_strided_slice %12 {offsets = [12, 0], sizes = [2, 128], strides = [1, 1]} : vector<16x128xf32> to vector<2x128xf32>
    %cst_47 = arith.constant dense<0.000000e+00> : vector<2x128xf32>
    %191 = tpu.matmul %188, %13, %cst_47 {dimension_numbers = #tpu.dot_dimension_numbers<[1], [0], [0], [1], [0, 0, 1, 1], [], []>} : vector<2x32xf32>, vector<32x128xf32>, vector<2x128xf32> -> vector<2x128xf32>
    %192 = arith.addf %190, %191 : vector<2x128xf32>
    %193 = vector.extract_strided_slice %192 {offsets = [0, 0], sizes = [2, 32], strides = [1, 1]} : vector<2x128xf32> to vector<2x32xf32>
    %194 = arith.negf %193 : vector<2x32xf32>
    %195 = math.exp %194 : vector<2x32xf32>
    %cst_48 = arith.constant 1.000000e+00 : f32
    %196 = vector.broadcast %cst_48 : f32 to vector<2x32xf32>
    %197 = arith.addf %196, %195 : vector<2x32xf32>
    %198 = arith.divf %196, %197 : vector<2x32xf32>
    %199 = vector.extract_strided_slice %192 {offsets = [0, 32], sizes = [2, 32], strides = [1, 1]} : vector<2x128xf32> to vector<2x32xf32>
    %200 = arith.negf %199 : vector<2x32xf32>
    %201 = math.exp %200 : vector<2x32xf32>
    %cst_49 = arith.constant 1.000000e+00 : f32
    %202 = vector.broadcast %cst_49 : f32 to vector<2x32xf32>
    %203 = arith.addf %202, %201 : vector<2x32xf32>
    %204 = arith.divf %202, %203 : vector<2x32xf32>
    %205 = vector.extract_strided_slice %192 {offsets = [0, 64], sizes = [2, 32], strides = [1, 1]} : vector<2x128xf32> to vector<2x32xf32>
    %206 = math.tanh %205 : vector<2x32xf32>
    %207 = vector.extract_strided_slice %192 {offsets = [0, 96], sizes = [2, 32], strides = [1, 1]} : vector<2x128xf32> to vector<2x32xf32>
    %208 = arith.negf %207 : vector<2x32xf32>
    %209 = math.exp %208 : vector<2x32xf32>
    %cst_50 = arith.constant 1.000000e+00 : f32
    %210 = vector.broadcast %cst_50 : f32 to vector<2x32xf32>
    %211 = arith.addf %210, %209 : vector<2x32xf32>
    %212 = arith.divf %210, %211 : vector<2x32xf32>
    %213 = arith.mulf %204, %186 : vector<2x32xf32>
    %214 = arith.mulf %198, %206 : vector<2x32xf32>
    %215 = arith.addf %213, %214 : vector<2x32xf32>
    %216 = math.tanh %215 : vector<2x32xf32>
    %217 = arith.mulf %212, %216 : vector<2x32xf32>
    %c12 = arith.constant 12 : index
    %c0_51 = arith.constant 0 : index
    %218 = vector.load %arg13[%c12, %c0_51] : memref<16x32xf32, #tpu.memory_space<vmem>>, vector<2x32xf32>
    tpu.vector_store %arg13[%c12, %c0_51], %217 {strides = array<i32>} : memref<16x32xf32, #tpu.memory_space<vmem>>, vector<2x32xf32>,
    %219 = vector.extract_strided_slice %12 {offsets = [14, 0], sizes = [2, 128], strides = [1, 1]} : vector<16x128xf32> to vector<2x128xf32>
    %cst_52 = arith.constant dense<0.000000e+00> : vector<2x128xf32>
    %220 = tpu.matmul %217, %13, %cst_52 {dimension_numbers = #tpu.dot_dimension_numbers<[1], [0], [0], [1], [0, 0, 1, 1], [], []>} : vector<2x32xf32>, vector<32x128xf32>, vector<2x128xf32> -> vector<2x128xf32>
    %221 = arith.addf %219, %220 : vector<2x128xf32>
    %222 = vector.extract_strided_slice %221 {offsets = [0, 0], sizes = [2, 32], strides = [1, 1]} : vector<2x128xf32> to vector<2x32xf32>
    %223 = arith.negf %222 : vector<2x32xf32>
    %224 = math.exp %223 : vector<2x32xf32>
    %cst_53 = arith.constant 1.000000e+00 : f32
    %225 = vector.broadcast %cst_53 : f32 to vector<2x32xf32>
    %226 = arith.addf %225, %224 : vector<2x32xf32>
    %227 = arith.divf %225, %226 : vector<2x32xf32>
    %228 = vector.extract_strided_slice %221 {offsets = [0, 32], sizes = [2, 32], strides = [1, 1]} : vector<2x128xf32> to vector<2x32xf32>
    %229 = arith.negf %228 : vector<2x32xf32>
    %230 = math.exp %229 : vector<2x32xf32>
    %cst_54 = arith.constant 1.000000e+00 : f32
    %231 = vector.broadcast %cst_54 : f32 to vector<2x32xf32>
    %232 = arith.addf %231, %230 : vector<2x32xf32>
    %233 = arith.divf %231, %232 : vector<2x32xf32>
    %234 = vector.extract_strided_slice %221 {offsets = [0, 64], sizes = [2, 32], strides = [1, 1]} : vector<2x128xf32> to vector<2x32xf32>
    %235 = math.tanh %234 : vector<2x32xf32>
    %236 = vector.extract_strided_slice %221 {offsets = [0, 96], sizes = [2, 32], strides = [1, 1]} : vector<2x128xf32> to vector<2x32xf32>
    %237 = arith.negf %236 : vector<2x32xf32>
    %238 = math.exp %237 : vector<2x32xf32>
    %cst_55 = arith.constant 1.000000e+00 : f32
    %239 = vector.broadcast %cst_55 : f32 to vector<2x32xf32>
    %240 = arith.addf %239, %238 : vector<2x32xf32>
    %241 = arith.divf %239, %240 : vector<2x32xf32>
    %242 = arith.mulf %233, %215 : vector<2x32xf32>
    %243 = arith.mulf %227, %235 : vector<2x32xf32>
    %244 = arith.addf %242, %243 : vector<2x32xf32>
    %245 = math.tanh %244 : vector<2x32xf32>
    %246 = arith.mulf %241, %245 : vector<2x32xf32>
    %c14 = arith.constant 14 : index
    %c0_56 = arith.constant 0 : index
    %247 = vector.load %arg13[%c14, %c0_56] : memref<16x32xf32, #tpu.memory_space<vmem>>, vector<2x32xf32>
    tpu.vector_store %arg13[%c14, %c0_56], %246 {strides = array<i32>} : memref<16x32xf32, #tpu.memory_space<vmem>>, vector<2x32xf32>,
    %c0_57 = arith.constant 0 : index
    %c0_58 = arith.constant 0 : index
    %248 = vector.load %arg13[%c0_57, %c0_58] : memref<16x32xf32, #tpu.memory_space<vmem>>, vector<16x32xf32>
    %c0_59 = arith.constant 0 : index
    %c0_60 = arith.constant 0 : index
    %249 = vector.load %arg6[%c0_59, %c0_60] : memref<32x128xf32, #tpu.memory_space<vmem>>, vector<32x128xf32>
    %cst_61 = arith.constant dense<0.000000e+00> : vector<16x128xf32>
    %250 = tpu.matmul %248, %249, %cst_61 {dimension_numbers = #tpu.dot_dimension_numbers<[1], [0], [0], [1], [0, 0, 1, 1], [], []>} : vector<16x32xf32>, vector<32x128xf32>, vector<16x128xf32> -> vector<16x128xf32>
    %c0_62 = arith.constant 0 : index
    %c0_63 = arith.constant 0 : index
    %251 = vector.load %arg8[%c0_62, %c0_63] : memref<1x128xf32, #tpu.memory_space<vmem>>, vector<1x128xf32>
    %252 = vector.broadcast %251 : vector<1x128xf32> to vector<16x128xf32>
    %253 = arith.addf %250, %252 : vector<16x128xf32>
    %c0_64 = arith.constant 0 : index
    %c0_65 = arith.constant 0 : index
    %254 = vector.load %arg7[%c0_64, %c0_65] : memref<32x128xf32, #tpu.memory_space<vmem>>, vector<32x128xf32>
    %cst_66 = arith.constant 0.000000e+00 : f32
    %255 = vector.broadcast %cst_66 : f32 to vector<2x32xf32>
    %cst_67 = arith.constant 0.000000e+00 : f32
    %256 = vector.broadcast %cst_67 : f32 to vector<2x32xf32>
    %257 = vector.extract_strided_slice %253 {offsets = [0, 0], sizes = [2, 128], strides = [1, 1]} : vector<16x128xf32> to vector<2x128xf32>
    %cst_68 = arith.constant dense<0.000000e+00> : vector<2x128xf32>
    %258 = tpu.matmul %255, %254, %cst_68 {dimension_numbers = #tpu.dot_dimension_numbers<[1], [0], [0], [1], [0, 0, 1, 1], [], []>} : vector<2x32xf32>, vector<32x128xf32>, vector<2x128xf32> -> vector<2x128xf32>
    %259 = arith.addf %257, %258 : vector<2x128xf32>
    %260 = vector.extract_strided_slice %259 {offsets = [0, 0], sizes = [2, 32], strides = [1, 1]} : vector<2x128xf32> to vector<2x32xf32>
    %261 = arith.negf %260 : vector<2x32xf32>
    %262 = math.exp %261 : vector<2x32xf32>
    %cst_69 = arith.constant 1.000000e+00 : f32
    %263 = vector.broadcast %cst_69 : f32 to vector<2x32xf32>
    %264 = arith.addf %263, %262 : vector<2x32xf32>
    %265 = arith.divf %263, %264 : vector<2x32xf32>
    %266 = vector.extract_strided_slice %259 {offsets = [0, 32], sizes = [2, 32], strides = [1, 1]} : vector<2x128xf32> to vector<2x32xf32>
    %267 = arith.negf %266 : vector<2x32xf32>
    %268 = math.exp %267 : vector<2x32xf32>
    %cst_70 = arith.constant 1.000000e+00 : f32
    %269 = vector.broadcast %cst_70 : f32 to vector<2x32xf32>
    %270 = arith.addf %269, %268 : vector<2x32xf32>
    %271 = arith.divf %269, %270 : vector<2x32xf32>
    %272 = vector.extract_strided_slice %259 {offsets = [0, 64], sizes = [2, 32], strides = [1, 1]} : vector<2x128xf32> to vector<2x32xf32>
    %273 = math.tanh %272 : vector<2x32xf32>
    %274 = vector.extract_strided_slice %259 {offsets = [0, 96], sizes = [2, 32], strides = [1, 1]} : vector<2x128xf32> to vector<2x32xf32>
    %275 = arith.negf %274 : vector<2x32xf32>
    %276 = math.exp %275 : vector<2x32xf32>
    %cst_71 = arith.constant 1.000000e+00 : f32
    %277 = vector.broadcast %cst_71 : f32 to vector<2x32xf32>
    %278 = arith.addf %277, %276 : vector<2x32xf32>
    %279 = arith.divf %277, %278 : vector<2x32xf32>
    %280 = arith.mulf %271, %256 : vector<2x32xf32>
    %281 = arith.mulf %265, %273 : vector<2x32xf32>
    %282 = arith.addf %280, %281 : vector<2x32xf32>
    %283 = math.tanh %282 : vector<2x32xf32>
    %284 = arith.mulf %279, %283 : vector<2x32xf32>
    %c0_72 = arith.constant 0 : index
    %c0_73 = arith.constant 0 : index
    %285 = vector.load %arg13[%c0_72, %c0_73] : memref<16x32xf32, #tpu.memory_space<vmem>>, vector<2x32xf32>
    tpu.vector_store %arg13[%c0_72, %c0_73], %284 {strides = array<i32>} : memref<16x32xf32, #tpu.memory_space<vmem>>, vector<2x32xf32>,
    %286 = vector.extract_strided_slice %253 {offsets = [2, 0], sizes = [2, 128], strides = [1, 1]} : vector<16x128xf32> to vector<2x128xf32>
    %cst_74 = arith.constant dense<0.000000e+00> : vector<2x128xf32>
    %287 = tpu.matmul %284, %254, %cst_74 {dimension_numbers = #tpu.dot_dimension_numbers<[1], [0], [0], [1], [0, 0, 1, 1], [], []>} : vector<2x32xf32>, vector<32x128xf32>, vector<2x128xf32> -> vector<2x128xf32>
    %288 = arith.addf %286, %287 : vector<2x128xf32>
    %289 = vector.extract_strided_slice %288 {offsets = [0, 0], sizes = [2, 32], strides = [1, 1]} : vector<2x128xf32> to vector<2x32xf32>
    %290 = arith.negf %289 : vector<2x32xf32>
    %291 = math.exp %290 : vector<2x32xf32>
    %cst_75 = arith.constant 1.000000e+00 : f32
    %292 = vector.broadcast %cst_75 : f32 to vector<2x32xf32>
    %293 = arith.addf %292, %291 : vector<2x32xf32>
    %294 = arith.divf %292, %293 : vector<2x32xf32>
    %295 = vector.extract_strided_slice %288 {offsets = [0, 32], sizes = [2, 32], strides = [1, 1]} : vector<2x128xf32> to vector<2x32xf32>
    %296 = arith.negf %295 : vector<2x32xf32>
    %297 = math.exp %296 : vector<2x32xf32>
    %cst_76 = arith.constant 1.000000e+00 : f32
    %298 = vector.broadcast %cst_76 : f32 to vector<2x32xf32>
    %299 = arith.addf %298, %297 : vector<2x32xf32>
    %300 = arith.divf %298, %299 : vector<2x32xf32>
    %301 = vector.extract_strided_slice %288 {offsets = [0, 64], sizes = [2, 32], strides = [1, 1]} : vector<2x128xf32> to vector<2x32xf32>
    %302 = math.tanh %301 : vector<2x32xf32>
    %303 = vector.extract_strided_slice %288 {offsets = [0, 96], sizes = [2, 32], strides = [1, 1]} : vector<2x128xf32> to vector<2x32xf32>
    %304 = arith.negf %303 : vector<2x32xf32>
    %305 = math.exp %304 : vector<2x32xf32>
    %cst_77 = arith.constant 1.000000e+00 : f32
    %306 = vector.broadcast %cst_77 : f32 to vector<2x32xf32>
    %307 = arith.addf %306, %305 : vector<2x32xf32>
    %308 = arith.divf %306, %307 : vector<2x32xf32>
    %309 = arith.mulf %300, %282 : vector<2x32xf32>
    %310 = arith.mulf %294, %302 : vector<2x32xf32>
    %311 = arith.addf %309, %310 : vector<2x32xf32>
    %312 = math.tanh %311 : vector<2x32xf32>
    %313 = arith.mulf %308, %312 : vector<2x32xf32>
    %c2_78 = arith.constant 2 : index
    %c0_79 = arith.constant 0 : index
    %314 = vector.load %arg13[%c2_78, %c0_79] : memref<16x32xf32, #tpu.memory_space<vmem>>, vector<2x32xf32>
    tpu.vector_store %arg13[%c2_78, %c0_79], %313 {strides = array<i32>} : memref<16x32xf32, #tpu.memory_space<vmem>>, vector<2x32xf32>,
    %315 = vector.extract_strided_slice %253 {offsets = [4, 0], sizes = [2, 128], strides = [1, 1]} : vector<16x128xf32> to vector<2x128xf32>
    %cst_80 = arith.constant dense<0.000000e+00> : vector<2x128xf32>
    %316 = tpu.matmul %313, %254, %cst_80 {dimension_numbers = #tpu.dot_dimension_numbers<[1], [0], [0], [1], [0, 0, 1, 1], [], []>} : vector<2x32xf32>, vector<32x128xf32>, vector<2x128xf32> -> vector<2x128xf32>
    %317 = arith.addf %315, %316 : vector<2x128xf32>
    %318 = vector.extract_strided_slice %317 {offsets = [0, 0], sizes = [2, 32], strides = [1, 1]} : vector<2x128xf32> to vector<2x32xf32>
    %319 = arith.negf %318 : vector<2x32xf32>
    %320 = math.exp %319 : vector<2x32xf32>
    %cst_81 = arith.constant 1.000000e+00 : f32
    %321 = vector.broadcast %cst_81 : f32 to vector<2x32xf32>
    %322 = arith.addf %321, %320 : vector<2x32xf32>
    %323 = arith.divf %321, %322 : vector<2x32xf32>
    %324 = vector.extract_strided_slice %317 {offsets = [0, 32], sizes = [2, 32], strides = [1, 1]} : vector<2x128xf32> to vector<2x32xf32>
    %325 = arith.negf %324 : vector<2x32xf32>
    %326 = math.exp %325 : vector<2x32xf32>
    %cst_82 = arith.constant 1.000000e+00 : f32
    %327 = vector.broadcast %cst_82 : f32 to vector<2x32xf32>
    %328 = arith.addf %327, %326 : vector<2x32xf32>
    %329 = arith.divf %327, %328 : vector<2x32xf32>
    %330 = vector.extract_strided_slice %317 {offsets = [0, 64], sizes = [2, 32], strides = [1, 1]} : vector<2x128xf32> to vector<2x32xf32>
    %331 = math.tanh %330 : vector<2x32xf32>
    %332 = vector.extract_strided_slice %317 {offsets = [0, 96], sizes = [2, 32], strides = [1, 1]} : vector<2x128xf32> to vector<2x32xf32>
    %333 = arith.negf %332 : vector<2x32xf32>
    %334 = math.exp %333 : vector<2x32xf32>
    %cst_83 = arith.constant 1.000000e+00 : f32
    %335 = vector.broadcast %cst_83 : f32 to vector<2x32xf32>
    %336 = arith.addf %335, %334 : vector<2x32xf32>
    %337 = arith.divf %335, %336 : vector<2x32xf32>
    %338 = arith.mulf %329, %311 : vector<2x32xf32>
    %339 = arith.mulf %323, %331 : vector<2x32xf32>
    %340 = arith.addf %338, %339 : vector<2x32xf32>
    %341 = math.tanh %340 : vector<2x32xf32>
    %342 = arith.mulf %337, %341 : vector<2x32xf32>
    %c4_84 = arith.constant 4 : index
    %c0_85 = arith.constant 0 : index
    %343 = vector.load %arg13[%c4_84, %c0_85] : memref<16x32xf32, #tpu.memory_space<vmem>>, vector<2x32xf32>
    tpu.vector_store %arg13[%c4_84, %c0_85], %342 {strides = array<i32>} : memref<16x32xf32, #tpu.memory_space<vmem>>, vector<2x32xf32>,
    %344 = vector.extract_strided_slice %253 {offsets = [6, 0], sizes = [2, 128], strides = [1, 1]} : vector<16x128xf32> to vector<2x128xf32>
    %cst_86 = arith.constant dense<0.000000e+00> : vector<2x128xf32>
    %345 = tpu.matmul %342, %254, %cst_86 {dimension_numbers = #tpu.dot_dimension_numbers<[1], [0], [0], [1], [0, 0, 1, 1], [], []>} : vector<2x32xf32>, vector<32x128xf32>, vector<2x128xf32> -> vector<2x128xf32>
    %346 = arith.addf %344, %345 : vector<2x128xf32>
    %347 = vector.extract_strided_slice %346 {offsets = [0, 0], sizes = [2, 32], strides = [1, 1]} : vector<2x128xf32> to vector<2x32xf32>
    %348 = arith.negf %347 : vector<2x32xf32>
    %349 = math.exp %348 : vector<2x32xf32>
    %cst_87 = arith.constant 1.000000e+00 : f32
    %350 = vector.broadcast %cst_87 : f32 to vector<2x32xf32>
    %351 = arith.addf %350, %349 : vector<2x32xf32>
    %352 = arith.divf %350, %351 : vector<2x32xf32>
    %353 = vector.extract_strided_slice %346 {offsets = [0, 32], sizes = [2, 32], strides = [1, 1]} : vector<2x128xf32> to vector<2x32xf32>
    %354 = arith.negf %353 : vector<2x32xf32>
    %355 = math.exp %354 : vector<2x32xf32>
    %cst_88 = arith.constant 1.000000e+00 : f32
    %356 = vector.broadcast %cst_88 : f32 to vector<2x32xf32>
    %357 = arith.addf %356, %355 : vector<2x32xf32>
    %358 = arith.divf %356, %357 : vector<2x32xf32>
    %359 = vector.extract_strided_slice %346 {offsets = [0, 64], sizes = [2, 32], strides = [1, 1]} : vector<2x128xf32> to vector<2x32xf32>
    %360 = math.tanh %359 : vector<2x32xf32>
    %361 = vector.extract_strided_slice %346 {offsets = [0, 96], sizes = [2, 32], strides = [1, 1]} : vector<2x128xf32> to vector<2x32xf32>
    %362 = arith.negf %361 : vector<2x32xf32>
    %363 = math.exp %362 : vector<2x32xf32>
    %cst_89 = arith.constant 1.000000e+00 : f32
    %364 = vector.broadcast %cst_89 : f32 to vector<2x32xf32>
    %365 = arith.addf %364, %363 : vector<2x32xf32>
    %366 = arith.divf %364, %365 : vector<2x32xf32>
    %367 = arith.mulf %358, %340 : vector<2x32xf32>
    %368 = arith.mulf %352, %360 : vector<2x32xf32>
    %369 = arith.addf %367, %368 : vector<2x32xf32>
    %370 = math.tanh %369 : vector<2x32xf32>
    %371 = arith.mulf %366, %370 : vector<2x32xf32>
    %c6_90 = arith.constant 6 : index
    %c0_91 = arith.constant 0 : index
    %372 = vector.load %arg13[%c6_90, %c0_91] : memref<16x32xf32, #tpu.memory_space<vmem>>, vector<2x32xf32>
    tpu.vector_store %arg13[%c6_90, %c0_91], %371 {strides = array<i32>} : memref<16x32xf32, #tpu.memory_space<vmem>>, vector<2x32xf32>,
    %373 = vector.extract_strided_slice %253 {offsets = [8, 0], sizes = [2, 128], strides = [1, 1]} : vector<16x128xf32> to vector<2x128xf32>
    %cst_92 = arith.constant dense<0.000000e+00> : vector<2x128xf32>
    %374 = tpu.matmul %371, %254, %cst_92 {dimension_numbers = #tpu.dot_dimension_numbers<[1], [0], [0], [1], [0, 0, 1, 1], [], []>} : vector<2x32xf32>, vector<32x128xf32>, vector<2x128xf32> -> vector<2x128xf32>
    %375 = arith.addf %373, %374 : vector<2x128xf32>
    %376 = vector.extract_strided_slice %375 {offsets = [0, 0], sizes = [2, 32], strides = [1, 1]} : vector<2x128xf32> to vector<2x32xf32>
    %377 = arith.negf %376 : vector<2x32xf32>
    %378 = math.exp %377 : vector<2x32xf32>
    %cst_93 = arith.constant 1.000000e+00 : f32
    %379 = vector.broadcast %cst_93 : f32 to vector<2x32xf32>
    %380 = arith.addf %379, %378 : vector<2x32xf32>
    %381 = arith.divf %379, %380 : vector<2x32xf32>
    %382 = vector.extract_strided_slice %375 {offsets = [0, 32], sizes = [2, 32], strides = [1, 1]} : vector<2x128xf32> to vector<2x32xf32>
    %383 = arith.negf %382 : vector<2x32xf32>
    %384 = math.exp %383 : vector<2x32xf32>
    %cst_94 = arith.constant 1.000000e+00 : f32
    %385 = vector.broadcast %cst_94 : f32 to vector<2x32xf32>
    %386 = arith.addf %385, %384 : vector<2x32xf32>
    %387 = arith.divf %385, %386 : vector<2x32xf32>
    %388 = vector.extract_strided_slice %375 {offsets = [0, 64], sizes = [2, 32], strides = [1, 1]} : vector<2x128xf32> to vector<2x32xf32>
    %389 = math.tanh %388 : vector<2x32xf32>
    %390 = vector.extract_strided_slice %375 {offsets = [0, 96], sizes = [2, 32], strides = [1, 1]} : vector<2x128xf32> to vector<2x32xf32>
    %391 = arith.negf %390 : vector<2x32xf32>
    %392 = math.exp %391 : vector<2x32xf32>
    %cst_95 = arith.constant 1.000000e+00 : f32
    %393 = vector.broadcast %cst_95 : f32 to vector<2x32xf32>
    %394 = arith.addf %393, %392 : vector<2x32xf32>
    %395 = arith.divf %393, %394 : vector<2x32xf32>
    %396 = arith.mulf %387, %369 : vector<2x32xf32>
    %397 = arith.mulf %381, %389 : vector<2x32xf32>
    %398 = arith.addf %396, %397 : vector<2x32xf32>
    %399 = math.tanh %398 : vector<2x32xf32>
    %400 = arith.mulf %395, %399 : vector<2x32xf32>
    %c8_96 = arith.constant 8 : index
    %c0_97 = arith.constant 0 : index
    %401 = vector.load %arg13[%c8_96, %c0_97] : memref<16x32xf32, #tpu.memory_space<vmem>>, vector<2x32xf32>
    tpu.vector_store %arg13[%c8_96, %c0_97], %400 {strides = array<i32>} : memref<16x32xf32, #tpu.memory_space<vmem>>, vector<2x32xf32>,
    %402 = vector.extract_strided_slice %253 {offsets = [10, 0], sizes = [2, 128], strides = [1, 1]} : vector<16x128xf32> to vector<2x128xf32>
    %cst_98 = arith.constant dense<0.000000e+00> : vector<2x128xf32>
    %403 = tpu.matmul %400, %254, %cst_98 {dimension_numbers = #tpu.dot_dimension_numbers<[1], [0], [0], [1], [0, 0, 1, 1], [], []>} : vector<2x32xf32>, vector<32x128xf32>, vector<2x128xf32> -> vector<2x128xf32>
    %404 = arith.addf %402, %403 : vector<2x128xf32>
    %405 = vector.extract_strided_slice %404 {offsets = [0, 0], sizes = [2, 32], strides = [1, 1]} : vector<2x128xf32> to vector<2x32xf32>
    %406 = arith.negf %405 : vector<2x32xf32>
    %407 = math.exp %406 : vector<2x32xf32>
    %cst_99 = arith.constant 1.000000e+00 : f32
    %408 = vector.broadcast %cst_99 : f32 to vector<2x32xf32>
    %409 = arith.addf %408, %407 : vector<2x32xf32>
    %410 = arith.divf %408, %409 : vector<2x32xf32>
    %411 = vector.extract_strided_slice %404 {offsets = [0, 32], sizes = [2, 32], strides = [1, 1]} : vector<2x128xf32> to vector<2x32xf32>
    %412 = arith.negf %411 : vector<2x32xf32>
    %413 = math.exp %412 : vector<2x32xf32>
    %cst_100 = arith.constant 1.000000e+00 : f32
    %414 = vector.broadcast %cst_100 : f32 to vector<2x32xf32>
    %415 = arith.addf %414, %413 : vector<2x32xf32>
    %416 = arith.divf %414, %415 : vector<2x32xf32>
    %417 = vector.extract_strided_slice %404 {offsets = [0, 64], sizes = [2, 32], strides = [1, 1]} : vector<2x128xf32> to vector<2x32xf32>
    %418 = math.tanh %417 : vector<2x32xf32>
    %419 = vector.extract_strided_slice %404 {offsets = [0, 96], sizes = [2, 32], strides = [1, 1]} : vector<2x128xf32> to vector<2x32xf32>
    %420 = arith.negf %419 : vector<2x32xf32>
    %421 = math.exp %420 : vector<2x32xf32>
    %cst_101 = arith.constant 1.000000e+00 : f32
    %422 = vector.broadcast %cst_101 : f32 to vector<2x32xf32>
    %423 = arith.addf %422, %421 : vector<2x32xf32>
    %424 = arith.divf %422, %423 : vector<2x32xf32>
    %425 = arith.mulf %416, %398 : vector<2x32xf32>
    %426 = arith.mulf %410, %418 : vector<2x32xf32>
    %427 = arith.addf %425, %426 : vector<2x32xf32>
    %428 = math.tanh %427 : vector<2x32xf32>
    %429 = arith.mulf %424, %428 : vector<2x32xf32>
    %c10_102 = arith.constant 10 : index
    %c0_103 = arith.constant 0 : index
    %430 = vector.load %arg13[%c10_102, %c0_103] : memref<16x32xf32, #tpu.memory_space<vmem>>, vector<2x32xf32>
    tpu.vector_store %arg13[%c10_102, %c0_103], %429 {strides = array<i32>} : memref<16x32xf32, #tpu.memory_space<vmem>>, vector<2x32xf32>,
    %431 = vector.extract_strided_slice %253 {offsets = [12, 0], sizes = [2, 128], strides = [1, 1]} : vector<16x128xf32> to vector<2x128xf32>
    %cst_104 = arith.constant dense<0.000000e+00> : vector<2x128xf32>
    %432 = tpu.matmul %429, %254, %cst_104 {dimension_numbers = #tpu.dot_dimension_numbers<[1], [0], [0], [1], [0, 0, 1, 1], [], []>} : vector<2x32xf32>, vector<32x128xf32>, vector<2x128xf32> -> vector<2x128xf32>
    %433 = arith.addf %431, %432 : vector<2x128xf32>
    %434 = vector.extract_strided_slice %433 {offsets = [0, 0], sizes = [2, 32], strides = [1, 1]} : vector<2x128xf32> to vector<2x32xf32>
    %435 = arith.negf %434 : vector<2x32xf32>
    %436 = math.exp %435 : vector<2x32xf32>
    %cst_105 = arith.constant 1.000000e+00 : f32
    %437 = vector.broadcast %cst_105 : f32 to vector<2x32xf32>
    %438 = arith.addf %437, %436 : vector<2x32xf32>
    %439 = arith.divf %437, %438 : vector<2x32xf32>
    %440 = vector.extract_strided_slice %433 {offsets = [0, 32], sizes = [2, 32], strides = [1, 1]} : vector<2x128xf32> to vector<2x32xf32>
    %441 = arith.negf %440 : vector<2x32xf32>
    %442 = math.exp %441 : vector<2x32xf32>
    %cst_106 = arith.constant 1.000000e+00 : f32
    %443 = vector.broadcast %cst_106 : f32 to vector<2x32xf32>
    %444 = arith.addf %443, %442 : vector<2x32xf32>
    %445 = arith.divf %443, %444 : vector<2x32xf32>
    %446 = vector.extract_strided_slice %433 {offsets = [0, 64], sizes = [2, 32], strides = [1, 1]} : vector<2x128xf32> to vector<2x32xf32>
    %447 = math.tanh %446 : vector<2x32xf32>
    %448 = vector.extract_strided_slice %433 {offsets = [0, 96], sizes = [2, 32], strides = [1, 1]} : vector<2x128xf32> to vector<2x32xf32>
    %449 = arith.negf %448 : vector<2x32xf32>
    %450 = math.exp %449 : vector<2x32xf32>
    %cst_107 = arith.constant 1.000000e+00 : f32
    %451 = vector.broadcast %cst_107 : f32 to vector<2x32xf32>
    %452 = arith.addf %451, %450 : vector<2x32xf32>
    %453 = arith.divf %451, %452 : vector<2x32xf32>
    %454 = arith.mulf %445, %427 : vector<2x32xf32>
    %455 = arith.mulf %439, %447 : vector<2x32xf32>
    %456 = arith.addf %454, %455 : vector<2x32xf32>
    %457 = math.tanh %456 : vector<2x32xf32>
    %458 = arith.mulf %453, %457 : vector<2x32xf32>
    %c12_108 = arith.constant 12 : index
    %c0_109 = arith.constant 0 : index
    %459 = vector.load %arg13[%c12_108, %c0_109] : memref<16x32xf32, #tpu.memory_space<vmem>>, vector<2x32xf32>
    tpu.vector_store %arg13[%c12_108, %c0_109], %458 {strides = array<i32>} : memref<16x32xf32, #tpu.memory_space<vmem>>, vector<2x32xf32>,
    %460 = vector.extract_strided_slice %253 {offsets = [14, 0], sizes = [2, 128], strides = [1, 1]} : vector<16x128xf32> to vector<2x128xf32>
    %cst_110 = arith.constant dense<0.000000e+00> : vector<2x128xf32>
    %461 = tpu.matmul %458, %254, %cst_110 {dimension_numbers = #tpu.dot_dimension_numbers<[1], [0], [0], [1], [0, 0, 1, 1], [], []>} : vector<2x32xf32>, vector<32x128xf32>, vector<2x128xf32> -> vector<2x128xf32>
    %462 = arith.addf %460, %461 : vector<2x128xf32>
    %463 = vector.extract_strided_slice %462 {offsets = [0, 0], sizes = [2, 32], strides = [1, 1]} : vector<2x128xf32> to vector<2x32xf32>
    %464 = arith.negf %463 : vector<2x32xf32>
    %465 = math.exp %464 : vector<2x32xf32>
    %cst_111 = arith.constant 1.000000e+00 : f32
    %466 = vector.broadcast %cst_111 : f32 to vector<2x32xf32>
    %467 = arith.addf %466, %465 : vector<2x32xf32>
    %468 = arith.divf %466, %467 : vector<2x32xf32>
    %469 = vector.extract_strided_slice %462 {offsets = [0, 32], sizes = [2, 32], strides = [1, 1]} : vector<2x128xf32> to vector<2x32xf32>
    %470 = arith.negf %469 : vector<2x32xf32>
    %471 = math.exp %470 : vector<2x32xf32>
    %cst_112 = arith.constant 1.000000e+00 : f32
    %472 = vector.broadcast %cst_112 : f32 to vector<2x32xf32>
    %473 = arith.addf %472, %471 : vector<2x32xf32>
    %474 = arith.divf %472, %473 : vector<2x32xf32>
    %475 = vector.extract_strided_slice %462 {offsets = [0, 64], sizes = [2, 32], strides = [1, 1]} : vector<2x128xf32> to vector<2x32xf32>
    %476 = math.tanh %475 : vector<2x32xf32>
    %477 = vector.extract_strided_slice %462 {offsets = [0, 96], sizes = [2, 32], strides = [1, 1]} : vector<2x128xf32> to vector<2x32xf32>
    %478 = arith.negf %477 : vector<2x32xf32>
    %479 = math.exp %478 : vector<2x32xf32>
    %cst_113 = arith.constant 1.000000e+00 : f32
    %480 = vector.broadcast %cst_113 : f32 to vector<2x32xf32>
    %481 = arith.addf %480, %479 : vector<2x32xf32>
    %482 = arith.divf %480, %481 : vector<2x32xf32>
    %483 = arith.mulf %474, %456 : vector<2x32xf32>
    %484 = arith.mulf %468, %476 : vector<2x32xf32>
    %485 = arith.addf %483, %484 : vector<2x32xf32>
    %486 = math.tanh %485 : vector<2x32xf32>
    %487 = arith.mulf %482, %486 : vector<2x32xf32>
    %c14_114 = arith.constant 14 : index
    %c0_115 = arith.constant 0 : index
    %488 = vector.load %arg13[%c14_114, %c0_115] : memref<16x32xf32, #tpu.memory_space<vmem>>, vector<2x32xf32>
    tpu.vector_store %arg13[%c14_114, %c0_115], %487 {strides = array<i32>} : memref<16x32xf32, #tpu.memory_space<vmem>>, vector<2x32xf32>,
    %c0_116 = arith.constant 0 : index
    %c0_117 = arith.constant 0 : index
    %489 = vector.load %arg9[%c0_116, %c0_117] : memref<1x32xf32, #tpu.memory_space<vmem>>, vector<1x32xf32>
    %490 = vector.broadcast %489 : vector<1x32xf32> to vector<2x32xf32>
    %491 = arith.mulf %487, %490 : vector<2x32xf32>
    %cst_118 = arith.constant dense<0.000000e+00> : vector<2xf32>
    %492 = vector.multi_reduction <add>, %491, %cst_118 [1] : vector<2x32xf32> to vector<2xf32>
    %493 = vector.shape_cast %492 : vector<2xf32> to vector<2x1xf32>
    %c0_119 = arith.constant 0 : index
    %c0_120 = arith.constant 0 : index
    %494 = vector.load %arg10[%c0_119, %c0_120] : memref<1x1xf32, #tpu.memory_space<vmem>>, vector<1x1xf32>
    %495 = vector.broadcast %494 : vector<1x1xf32> to vector<2x1xf32>
    %496 = arith.addf %493, %495 : vector<2x1xf32>
    %c0_121 = arith.constant 0 : index
    %c0_122 = arith.constant 0 : index
    %497 = vector.load %arg12[%c0_121, %c0_122] : memref<2x1xf32, #tpu.memory_space<vmem>>, vector<2x1xf32>
    tpu.vector_store %arg12[%c0_121, %c0_122], %496 {strides = array<i32>} : memref<2x1xf32, #tpu.memory_space<vmem>>, vector<2x1xf32>,
    return
  }
}

</mosaic_0001>

<llo_original>
// kernel: day_model_1_forward.1
$region0: #{day_model_1_forward.1}
  #allocation0 [shape = 'u32[]', space=smem, size = 0x4, offset = 0x4, fixed_abs, tag = 'smem constant byte address 0x4 - core index']
  #allocation1 [shape = 'u32[144,128]{1,0:T(1,128)}', space=vmem, size = 0x12000, scoped, tag = 'internal scratch']
  #allocation2 [shape = 'f32[16,32]{1,0:T(8,128)}', space=vmem, size = 0x2000, scoped, tag = 'scratch operand']
  #allocation3 [shape = 'f32[1,1]{1,0:T(1,128)S(1)}', space=vmem, size = 0x200, scoped, tag = 'scoped memory for day_model_1_forward.1']
  %s0 = inlined_call_operand.vmem [shape: f32[16,16], index: 0, kind: input, shape index: {}]
  %s1 = inlined_call_operand.hbm [shape: f32[16,32], index: 1, kind: input, shape index: {}]
  %s2 = inlined_call_operand.hbm [shape: f32[1,32], index: 2, kind: input, shape index: {}]
  %s3 = inlined_call_operand.vmem [shape: f32[32,128], index: 3, kind: input, shape index: {}]
  %s4 = inlined_call_operand.vmem [shape: f32[32,128], index: 4, kind: input, shape index: {}]
  %s5 = inlined_call_operand.hbm [shape: f32[1,128], index: 5, kind: input, shape index: {}]
  %s6 = inlined_call_operand.vmem [shape: f32[32,128], index: 6, kind: input, shape index: {}]
  %s7 = inlined_call_operand.hbm [shape: f32[32,128], index: 7, kind: input, shape index: {}]
  %s8 = inlined_call_operand.hbm [shape: f32[1,128], index: 8, kind: input, shape index: {}]
  %s9 = inlined_call_operand.hbm [shape: f32[1,32], index: 9, kind: input, shape index: {}]
  %s10 = inlined_call_operand.<no memory space> [shape: f32[1,1], index: 10, kind: input, shape index: {}]
  %s11 = inlined_call_operand.vmem [shape: f32[16,32], index: 11, kind: output, shape index: {0}]
  %s12 = inlined_call_operand.vmem [shape: f32[2,1], index: 12, kind: output, shape index: {1}]
  %13 = xla_tuple %s11, %s12
  %s14 = sld [smem:[#allocation0]]
  $region86: #{day_model_1_forward.1} parent=0
    _
  %s16 = ssub.s32 1, %s14
  %s17 = scalar_select 0, %s16, %s14
  %v18 = vstv %s10
  %19 = vst [vmem:[#allocation3] sm:$0x1] %v18
  $region1: #{day_model_1_forward.1} parent=0
    #allocation4 [shape = 'u8[8192]{0}', space=vmem, size = 0x2000, scoped, tag = 'input window, operand 1, single buffered']
    #allocation5 [shape = 's32[1]{0}', space=sflag, size = 0x4, scoped, tag = 'scoped memory for day_model_1_forward.1']
    #allocation6 [shape = 'u8[512]{0}', space=vmem, size = 0x400, scoped, tag = 'input window, operand 2, single buffered']
    #allocation7 [shape = 's32[1]{0}', space=sflag, size = 0x4, scoped, tag = 'scoped memory for day_model_1_forward.1']
    #allocation8 [shape = 'u8[512]{0}', space=vmem, size = 0x400, scoped, tag = 'input window, operand 5, single buffered']
    #allocation9 [shape = 'u8[16384]{0}', space=vmem, size = 0x4000, scoped, tag = 'input window, operand 7, single buffered']
    #allocation10 [shape = 's32[1]{0}', space=sflag, size = 0x4, scoped, tag = 'scoped memory for day_model_1_forward.1']
    #allocation11 [shape = 'u8[512]{0}', space=vmem, size = 0x400, scoped, tag = 'input window, operand 8, single buffered']
    #allocation12 [shape = 'u8[512]{0}', space=vmem, size = 0x400, scoped, tag = 'input window, operand 9, single buffered']
    #allocation13 [shape = 's32[1]{0}', space=sflag, size = 0x4, scoped, tag = 'scoped memory for day_model_1_forward.1']
    %20 = vsyncpa [#allocation5], 0
    %21 = vsyncpa [#allocation7], 0
    %22 = vsyncpa [#allocation10], 0
    %23 = vsyncpa [#allocation13], 0
    // Predicated region
    $region2: #{day_model_1_forward.1} parent=1 // pred_check
      _
    $region3: #{day_model_1_forward.1} parent=1 // pred_check_branch
      %25 = sbr.rel (0) target = $region5
    $region4: #{day_model_1_forward.1} parent=1 // pred_region
      _
    $region5: #{day_model_1_forward.1} parent=1 // pred_fallthru
      _
    // Predicated region
    $region6: #{day_model_1_forward.1} parent=1 // pred_check
      _
    $region7: #{day_model_1_forward.1} parent=1 // pred_check_branch
      %27 = sbr.rel (0) target = $region9
    $region8: #{day_model_1_forward.1} parent=1 // pred_region
      %s29 = ssub.s32 256, 256
      %30 = vsyncadd [#allocation5], %s29
      %s31 = sshll.u32 [#allocation4], 4
      %s32 = int_to_ptr.vmem [resolvable:$true] %s31
      %37 = dma.hbm_to_vmem [thread:$0]  %s1, 256, %s32, [#allocation5], 128, 128, 8
    $region9: #{day_model_1_forward.1} parent=1 // pred_fallthru
      _
    // Predicated region
    $region10: #{day_model_1_forward.1} parent=1 // pred_check
      _
    $region11: #{day_model_1_forward.1} parent=1 // pred_check_branch
      %39 = sbr.rel (0) target = $region13
    $region12: #{day_model_1_forward.1} parent=1 // pred_region
      %s41 = ssub.s32 16, 16
      %42 = vsyncadd [#allocation7], %s41
      %s44 = sshll.u32 [#allocation6], 4
      %s45 = int_to_ptr.vmem [resolvable:$true] %s44
      %47 = dma.hbm_to_vmem [thread:$0]  %s2, 16, %s45, [#allocation7]
    $region13: #{day_model_1_forward.1} parent=1 // pred_fallthru
      _
    // Predicated region
    $region14: #{day_model_1_forward.1} parent=1 // pred_check
      _
    $region15: #{day_model_1_forward.1} parent=1 // pred_check_branch
      %49 = sbr.rel (0) target = $region17
    $region16: #{day_model_1_forward.1} parent=1 // pred_region
      _
    $region17: #{day_model_1_forward.1} parent=1 // pred_fallthru
      _
    // Predicated region
    $region18: #{day_model_1_forward.1} parent=1 // pred_check
      _
    $region19: #{day_model_1_forward.1} parent=1 // pred_check_branch
      %51 = sbr.rel (0) target = $region21
    $region20: #{day_model_1_forward.1} parent=1 // pred_region
      _
    $region21: #{day_model_1_forward.1} parent=1 // pred_fallthru
      _
    // Predicated region
    $region22: #{day_model_1_forward.1} parent=1 // pred_check
      _
    $region23: #{day_model_1_forward.1} parent=1 // pred_check_branch
      %53 = sbr.rel (0) target = $region25
    $region24: #{day_model_1_forward.1} parent=1 // pred_region
      %s55 = ssub.s32 16, 16
      %56 = vsyncadd [#allocation7], %s55
      %s58 = sshll.u32 [#allocation8], 4
      %s59 = int_to_ptr.vmem [resolvable:$true] %s58
      %61 = dma.hbm_to_vmem [thread:$0]  %s5, 16, %s59, [#allocation7]
    $region25: #{day_model_1_forward.1} parent=1 // pred_fallthru
      _
    // Predicated region
    $region26: #{day_model_1_forward.1} parent=1 // pred_check
      _
    $region27: #{day_model_1_forward.1} parent=1 // pred_check_branch
      %63 = sbr.rel (0) target = $region29
    $region28: #{day_model_1_forward.1} parent=1 // pred_region
      _
    $region29: #{day_model_1_forward.1} parent=1 // pred_fallthru
      _
    // Predicated region
    $region30: #{day_model_1_forward.1} parent=1 // pred_check
      _
    $region31: #{day_model_1_forward.1} parent=1 // pred_check_branch
      %65 = sbr.rel (0) target = $region33
    $region32: #{day_model_1_forward.1} parent=1 // pred_region
      %s67 = ssub.s32 512, 512
      %68 = vsyncadd [#allocation10], %s67
      %s69 = sshll.u32 [#allocation9], 4
      %s70 = int_to_ptr.vmem [resolvable:$true] %s69
      %75 = dma.hbm_to_vmem [thread:$0]  %s7, 512, %s70, [#allocation10], 128, 128, 8
    $region33: #{day_model_1_forward.1} parent=1 // pred_fallthru
      _
    // Predicated region
    $region34: #{day_model_1_forward.1} parent=1 // pred_check
      _
    $region35: #{day_model_1_forward.1} parent=1 // pred_check_branch
      %77 = sbr.rel (0) target = $region37
    $region36: #{day_model_1_forward.1} parent=1 // pred_region
      %s79 = ssub.s32 16, 16
      %80 = vsyncadd [#allocation10], %s79
      %s82 = sshll.u32 [#allocation11], 4
      %s83 = int_to_ptr.vmem [resolvable:$true] %s82
      %85 = dma.hbm_to_vmem [thread:$0]  %s8, 16, %s83, [#allocation10]
    $region37: #{day_model_1_forward.1} parent=1 // pred_fallthru
      _
    // Predicated region
    $region38: #{day_model_1_forward.1} parent=1 // pred_check
      _
    $region39: #{day_model_1_forward.1} parent=1 // pred_check_branch
      %87 = sbr.rel (0) target = $region41
    $region40: #{day_model_1_forward.1} parent=1 // pred_region
      %s89 = ssub.s32 16, 16
      %90 = vsyncadd [#allocation13], %s89
      %s92 = sshll.u32 [#allocation12], 4
      %s93 = int_to_ptr.vmem [resolvable:$true] %s92
      %95 = dma.hbm_to_vmem [thread:$0]  %s9, 16, %s93, [#allocation13]
    $region41: #{day_model_1_forward.1} parent=1 // pred_fallthru
      _
    // Predicated region
    $region42: #{day_model_1_forward.1} parent=1 // pred_check
      _
    $region43: #{day_model_1_forward.1} parent=1 // pred_check_branch
      %97 = sbr.rel (0) target = $region45
    $region44: #{day_model_1_forward.1} parent=1 // pred_region
      _
    $region45: #{day_model_1_forward.1} parent=1 // pred_fallthru
      _
    // Predicated region
    $region46: #{day_model_1_forward.1} parent=1 // pred_check
      _
    $region47: #{day_model_1_forward.1} parent=1 // pred_check_branch
      %99 = sbr.rel (0) target = $region49
    $region48: #{day_model_1_forward.1} parent=1 // pred_region
      %100 = dma.done [#allocation5], 256
    $region49: #{day_model_1_forward.1} parent=1 // pred_fallthru
      _
    // Predicated region
    $region50: #{day_model_1_forward.1} parent=1 // pred_check
      _
    $region51: #{day_model_1_forward.1} parent=1 // pred_check_branch
      %102 = sbr.rel (0) target = $region53
    $region52: #{day_model_1_forward.1} parent=1 // pred_region
      %103 = dma.done [#allocation7], 16
    $region53: #{day_model_1_forward.1} parent=1 // pred_fallthru
      _
    // Predicated region
    $region54: #{day_model_1_forward.1} parent=1 // pred_check
      _
    $region55: #{day_model_1_forward.1} parent=1 // pred_check_branch
      %105 = sbr.rel (0) target = $region57
    $region56: #{day_model_1_forward.1} parent=1 // pred_region
      %106 = dma.done [#allocation7], 16
    $region57: #{day_model_1_forward.1} parent=1 // pred_fallthru
      _
    // Predicated region
    $region58: #{day_model_1_forward.1} parent=1 // pred_check
      _
    $region59: #{day_model_1_forward.1} parent=1 // pred_check_branch
      %108 = sbr.rel (0) target = $region61
    $region60: #{day_model_1_forward.1} parent=1 // pred_region
      %109 = dma.done [#allocation10], 512
    $region61: #{day_model_1_forward.1} parent=1 // pred_fallthru
      _
    // Predicated region
    $region62: #{day_model_1_forward.1} parent=1 // pred_check
      _
    $region63: #{day_model_1_forward.1} parent=1 // pred_check_branch
      %111 = sbr.rel (0) target = $region65
    $region64: #{day_model_1_forward.1} parent=1 // pred_region
      %112 = dma.done [#allocation10], 16
    $region65: #{day_model_1_forward.1} parent=1 // pred_fallthru
      _
    // Predicated region
    $region66: #{day_model_1_forward.1} parent=1 // pred_check
      _
    $region67: #{day_model_1_forward.1} parent=1 // pred_check_branch
      %114 = sbr.rel (0) target = $region69
    $region68: #{day_model_1_forward.1} parent=1 // pred_region
      %115 = dma.done [#allocation13], 16
    $region69: #{day_model_1_forward.1} parent=1 // pred_fallthru
      _
    %v116 = vld [vmem:[%s0] sm:$0xff]
    %v117 = vld [vmem:[%s0 + $0x8] sm:$0xff]
    %v118 = vld [vmem:[#allocation4] sm:$0xff]
    %v119 = vld [vmem:[#allocation4 + $0x8] sm:$0xff]
    %v120 = vld [vmem:[#allocation6] sm:$0x1]
    %v122 = vlaneseq
    %v123 = vshrl.u32 %v122, 7
    %v124 = vsub.s32 0, %v123
    %v125 = vrot.slane %v120, %v124
    %vm127 = vcmask 130048
    %v129 = vsel %vm127, %v116, 0
    %v132 = vsel %vm127, %v117, 0
    %134 = vmatprep.subr.mxu0 0.0
    %135 = vmatpush1.msra.mxu0 %v118
    %136 = vmatprep.subr.mxu0 0.0
    %137 = vmatpush1.msra.mxu0 %v119
    %138 = vmatprep.subr.mxu0 0.0
    %139 = vmatpush1.msra.mxu0 0.0
    %140 = vmatprep.subr.mxu0 0.0
    %141 = vmatpush1.msra.mxu0 0.0
    %142 = vmatprep.subr.mxu0 0.0
    %143 = vmatpush1.msra.mxu0 0.0
    %144 = vmatprep.subr.mxu0 0.0
    %145 = vmatpush1.msra.mxu0 0.0
    %146 = vmatprep.subr.mxu0 0.0
    %147 = vmatpush1.msra.mxu0 0.0
    %148 = vmatprep.subr.mxu0 0.0
    %149 = vmatpush1.msra.mxu0 0.0
    %150 = vmatprep.subr.mxu0 0.0
    %151 = vmatpush1.msra.mxu0 0.0
    %152 = vmatprep.subr.mxu0 0.0
    %153 = vmatpush1.msra.mxu0 0.0
    %154 = vmatprep.subr.mxu0 0.0
    %155 = vmatpush1.msra.mxu0 0.0
    %156 = vmatprep.subr.mxu0 0.0
    %157 = vmatpush1.msra.mxu0 0.0
    %158 = vmatprep.subr.mxu0 0.0
    %159 = vmatpush1.msra.mxu0 0.0
    %160 = vmatprep.subr.mxu0 0.0
    %161 = vmatpush1.msra.mxu0 0.0
    %162 = vmatprep.subr.mxu0 0.0
    %163 = vmatpush1.msra.mxu0 0.0
    %164 = vmatprep.subr.mxu0 0.0
    %165 = vmatpush1.msra.mxu0 0.0
    %166 = vmatprep.subr.mxu0 0.0
    %167 = vmatpush1.msra.mxu0 0.0
    %168 = vmatprep.subr.mxu0 0.0
    %169 = vmatpush1.msra.mxu0 0.0
    %170 = vmatprep.subr.mxu0 0.0
    %171 = vmatpush1.msra.mxu0 0.0
    %172 = vmatprep.subr.mxu0 0.0
    %173 = vmatpush1.msra.mxu0 0.0
    %174 = vmatprep.subr.mxu0 0.0
    %175 = vmatpush1.msra.mxu0 0.0
    %176 = vmatprep.subr.mxu0 0.0
    %177 = vmatpush1.msra.mxu0 0.0
    %178 = vmatprep.subr.mxu0 0.0
    %179 = vmatpush1.msra.mxu0 0.0
    %180 = vmatprep.subr.mxu0 0.0
    %181 = vmatpush1.msra.mxu0 0.0
    %182 = vmatprep.subr.mxu0 0.0
    %183 = vmatpush1.msra.mxu0 0.0
    %184 = vmatprep.subr.mxu0 0.0
    %185 = vmatpush1.msra.mxu0 0.0
    %186 = vmatprep.subr.mxu0 0.0
    %187 = vmatpush1.msra.mxu0 0.0
    %188 = vmatprep.subr.mxu0 0.0
    %189 = vmatpush1.msra.mxu0 0.0
    %190 = vmatprep.subr.mxu0 0.0
    %191 = vmatpush1.msra.mxu0 0.0
    %192 = vmatprep.subr.mxu0 0.0
    %193 = vmatpush1.msra.mxu0 0.0
    %194 = vmatprep.subr.mxu0 0.0
    %195 = vmatpush1.msra.mxu0 0.0
    %196 = vmatprep.subr.mxu0 0.0
    %197 = vmatpush1.msra.mxu0 0.0
    %198 = vmatprep.mubr.f32.mxu0 0.0
    %199 = vmatmul.mubr.f32.gmra.mrb[0].mxu0 %v129
    %v200 = vpop.f32.mrb[0].mxu0
    %v201 = vadd.f32 %v125, %v200
    %v202 = vpop.f32.mrb[0].mxu0
    %203 = vmatprep.mubr.f32.mxu0 0.0
    %204 = vmatmul.mubr.f32.gmra.mrb[0].mxu0 %v132
    %v205 = vpop.f32.mrb[0].mxu0
    %v206 = vadd.f32 %v125, %v205
    %v207 = vpop.f32.mrb[0].mxu0
    %208 = vdwg.mxu0
    %v209 = vtanh.pop %v201
    %v210 = vtanh.pop %v206
    %vm211 = vcmask 261120
    %212 = vst.msk [vmem:[%s11] sm:$0xff] %vm211, %v209
    %213 = vst.msk [vmem:[%s11 + $0x8] sm:$0xff] %vm211, %v210
    %v214 = vld [vmem:[%s3] sm:$0xff]
    %v215 = vld [vmem:[%s3 + $0x8] sm:$0xff]
    %v216 = vld [vmem:[%s3 + $0x10] sm:$0xff]
    %v217 = vld [vmem:[%s3 + $0x18] sm:$0xff]
    %v218 = vld [vmem:[#allocation8] sm:$0x1]
    %v220 = vlaneseq
    %v221 = vshrl.u32 %v220, 7
    %v222 = vsub.s32 0, %v221
    %v223 = vrot.slane %v218, %v222
    %v226 = vsel %vm211, %v209, 0
    %v229 = vsel %vm211, %v210, 0
    %231 = vmatprep.subr.mxu0 0.0
    %232 = vmatpush1.msra.mxu0 %v214
    %233 = vmatprep.subr.mxu0 0.0
    %234 = vmatpush1.msra.mxu0 %v215
    %235 = vmatprep.subr.mxu0 0.0
    %236 = vmatpush1.msra.mxu0 %v216
    %237 = vmatprep.subr.mxu0 0.0
    %238 = vmatpush1.msra.mxu0 %v217
    %239 = vmatprep.subr.mxu0 0.0
    %240 = vmatpush1.msra.mxu0 0.0
    %241 = vmatprep.subr.mxu0 0.0
    %242 = vmatpush1.msra.mxu0 0.0
    %243 = vmatprep.subr.mxu0 0.0
    %244 = vmatpush1.msra.mxu0 0.0
    %245 = vmatprep.subr.mxu0 0.0
    %246 = vmatpush1.msra.mxu0 0.0
    %247 = vmatprep.subr.mxu0 0.0
    %248 = vmatpush1.msra.mxu0 0.0
    %249 = vmatprep.subr.mxu0 0.0
    %250 = vmatpush1.msra.mxu0 0.0
    %251 = vmatprep.subr.mxu0 0.0
    %252 = vmatpush1.msra.mxu0 0.0
    %253 = vmatprep.subr.mxu0 0.0
    %254 = vmatpush1.msra.mxu0 0.0
    %255 = vmatprep.subr.mxu0 0.0
    %256 = vmatpush1.msra.mxu0 0.0
    %257 = vmatprep.subr.mxu0 0.0
    %258 = vmatpush1.msra.mxu0 0.0
    %259 = vmatprep.subr.mxu0 0.0
    %260 = vmatpush1.msra.mxu0 0.0
    %261 = vmatprep.subr.mxu0 0.0
    %262 = vmatpush1.msra.mxu0 0.0
    %263 = vmatprep.subr.mxu0 0.0
    %264 = vmatpush1.msra.mxu0 0.0
    %265 = vmatprep.subr.mxu0 0.0
    %266 = vmatpush1.msra.mxu0 0.0
    %267 = vmatprep.subr.mxu0 0.0
    %268 = vmatpush1.msra.mxu0 0.0
    %269 = vmatprep.subr.mxu0 0.0
    %270 = vmatpush1.msra.mxu0 0.0
    %271 = vmatprep.subr.mxu0 0.0
    %272 = vmatpush1.msra.mxu0 0.0
    %273 = vmatprep.subr.mxu0 0.0
    %274 = vmatpush1.msra.mxu0 0.0
    %275 = vmatprep.subr.mxu0 0.0
    %276 = vmatpush1.msra.mxu0 0.0
    %277 = vmatprep.subr.mxu0 0.0
    %278 = vmatpush1.msra.mxu0 0.0
    %279 = vmatprep.subr.mxu0 0.0
    %280 = vmatpush1.msra.mxu0 0.0
    %281 = vmatprep.subr.mxu0 0.0
    %282 = vmatpush1.msra.mxu0 0.0
    %283 = vmatprep.subr.mxu0 0.0
    %284 = vmatpush1.msra.mxu0 0.0
    %285 = vmatprep.subr.mxu0 0.0
    %286 = vmatpush1.msra.mxu0 0.0
    %287 = vmatprep.subr.mxu0 0.0
    %288 = vmatpush1.msra.mxu0 0.0
    %289 = vmatprep.subr.mxu0 0.0
    %290 = vmatpush1.msra.mxu0 0.0
    %291 = vmatprep.subr.mxu0 0.0
    %292 = vmatpush1.msra.mxu0 0.0
    %293 = vmatprep.subr.mxu0 0.0
    %294 = vmatpush1.msra.mxu0 0.0
    %295 = vmatprep.mubr.f32.mxu0 0.0
    %296 = vmatmul.mubr.f32.gmra.mrb[0].mxu0 %v226
    %v297 = vpop.f32.mrb[0].mxu0
    %v298 = vadd.f32 %v223, %v297
    %v299 = vpop.f32.mrb[0].mxu0
    %300 = vmatprep.mubr.f32.mxu0 0.0
    %301 = vmatmul.mubr.f32.gmra.mrb[0].mxu0 %v229
    %v302 = vpop.f32.mrb[0].mxu0
    %v303 = vadd.f32 %v223, %v302
    %v304 = vpop.f32.mrb[0].mxu0
    %305 = vdwg.mxu0
    %v306 = vld [vmem:[%s4] sm:$0xff]
    %v307 = vld [vmem:[%s4 + $0x8] sm:$0xff]
    %v308 = vld [vmem:[%s4 + $0x10] sm:$0xff]
    %v309 = vld [vmem:[%s4 + $0x18] sm:$0xff]
    %v311 = vsel %vm211, 0.0, 0
    %313 = vmatprep.subr.mxu0 0.0
    %314 = vmatpush1.msra.mxu0 %v306
    %315 = vmatprep.subr.mxu0 0.0
    %316 = vmatpush1.msra.mxu0 %v307
    %317 = vmatprep.subr.mxu0 0.0
    %318 = vmatpush1.msra.mxu0 %v308
    %319 = vmatprep.subr.mxu0 0.0
    %320 = vmatpush1.msra.mxu0 %v309
    %321 = vmatprep.subr.mxu0 0.0
    %322 = vmatpush1.msra.mxu0 0.0
    %323 = vmatprep.subr.mxu0 0.0
    %324 = vmatpush1.msra.mxu0 0.0
    %325 = vmatprep.subr.mxu0 0.0
    %326 = vmatpush1.msra.mxu0 0.0
    %327 = vmatprep.subr.mxu0 0.0
    %328 = vmatpush1.msra.mxu0 0.0
    %329 = vmatprep.subr.mxu0 0.0
    %330 = vmatpush1.msra.mxu0 0.0
    %331 = vmatprep.subr.mxu0 0.0
    %332 = vmatpush1.msra.mxu0 0.0
    %333 = vmatprep.subr.mxu0 0.0
    %334 = vmatpush1.msra.mxu0 0.0
    %335 = vmatprep.subr.mxu0 0.0
    %336 = vmatpush1.msra.mxu0 0.0
    %337 = vmatprep.subr.mxu0 0.0
    %338 = vmatpush1.msra.mxu0 0.0
    %339 = vmatprep.subr.mxu0 0.0
    %340 = vmatpush1.msra.mxu0 0.0
    %341 = vmatprep.subr.mxu0 0.0
    %342 = vmatpush1.msra.mxu0 0.0
    %343 = vmatprep.subr.mxu0 0.0
    %344 = vmatpush1.msra.mxu0 0.0
    %345 = vmatprep.subr.mxu0 0.0
    %346 = vmatpush1.msra.mxu0 0.0
    %347 = vmatprep.subr.mxu0 0.0
    %348 = vmatpush1.msra.mxu0 0.0
    %349 = vmatprep.subr.mxu0 0.0
    %350 = vmatpush1.msra.mxu0 0.0
    %351 = vmatprep.subr.mxu0 0.0
    %352 = vmatpush1.msra.mxu0 0.0
    %353 = vmatprep.subr.mxu0 0.0
    %354 = vmatpush1.msra.mxu0 0.0
    %355 = vmatprep.subr.mxu0 0.0
    %356 = vmatpush1.msra.mxu0 0.0
    %357 = vmatprep.subr.mxu0 0.0
    %358 = vmatpush1.msra.mxu0 0.0
    %359 = vmatprep.subr.mxu0 0.0
    %360 = vmatpush1.msra.mxu0 0.0
    %361 = vmatprep.subr.mxu0 0.0
    %362 = vmatpush1.msra.mxu0 0.0
    %363 = vmatprep.subr.mxu0 0.0
    %364 = vmatpush1.msra.mxu0 0.0
    %365 = vmatprep.subr.mxu0 0.0
    %366 = vmatpush1.msra.mxu0 0.0
    %367 = vmatprep.subr.mxu0 0.0
    %368 = vmatpush1.msra.mxu0 0.0
    %369 = vmatprep.subr.mxu0 0.0
    %370 = vmatpush1.msra.mxu0 0.0
    %371 = vmatprep.subr.mxu0 0.0
    %372 = vmatpush1.msra.mxu0 0.0
    %373 = vmatprep.subr.mxu0 0.0
    %374 = vmatpush1.msra.mxu0 0.0
    %375 = vmatprep.subr.mxu0 0.0
    %376 = vmatpush1.msra.mxu0 0.0
    %377 = vmatprep.mubr.f32.mxu0 0.0
    %378 = vmatmul.mubr.f32.gmra.mrb[0].mxu0 %v311
    %v379 = vpop.f32.mrb[0].mxu0
    %v380 = vadd.f32 0.0, %v379
    %v381 = vpop.f32.mrb[0].mxu0
    %382 = vdwg.mxu0
    %v383 = vadd.f32 %v298, %v380
    %v384 = vxor.u32 %v383, 2147483648
    %v385 = vmul.f32 %v384, 1.442695
    %v386 = vpow.pop %v385
    %v387 = vadd.f32 %v386, 1.0
    %v388 = vrcp.pop %v387
    %v389 = vmul.f32 1.0, %v388
    %v390 = vtanh.pop %v383
    %v391 = vmul.f32 %v389, 0.0
    %393 = vrot.lane.b32.xlu0 %v390, 64
    %v394 = vpop.permute.xlu0 %393
    %v396 = vmul.f32 %v389, %v394
    %398 = vrot.lane.b32.xlu0 %v396, 32
    %v399 = vpop.permute.xlu0 %398
    %v401 = vadd.f32 %v391, %v399
    %v402 = vtanh.pop %v401
    %404 = vrot.lane.b32.xlu0 %v402, 64
    %v405 = vpop.permute.xlu0 %404
    %v407 = vmul.f32 %v389, %v405
    %409 = vrot.lane.b32.xlu0 %v407, 32
    %v410 = vpop.permute.xlu0 %409
    %vm412 = vcmask 254976
    %413 = vst.msk [vmem:[#allocation2] sm:$0x3] %vm412, %v410
    %v414 = vsel %vm211, %v410, 0
    %416 = vmatprep.subr.mxu0 0.0
    %417 = vmatpush1.msra.mxu0 %v306
    %418 = vmatprep.subr.mxu0 0.0
    %419 = vmatpush1.msra.mxu0 %v307
    %420 = vmatprep.subr.mxu0 0.0
    %421 = vmatpush1.msra.mxu0 %v308
    %422 = vmatprep.subr.mxu0 0.0
    %423 = vmatpush1.msra.mxu0 %v309
    %424 = vmatprep.subr.mxu0 0.0
    %425 = vmatpush1.msra.mxu0 0.0
    %426 = vmatprep.subr.mxu0 0.0
    %427 = vmatpush1.msra.mxu0 0.0
    %428 = vmatprep.subr.mxu0 0.0
    %429 = vmatpush1.msra.mxu0 0.0
    %430 = vmatprep.subr.mxu0 0.0
    %431 = vmatpush1.msra.mxu0 0.0
    %432 = vmatprep.subr.mxu0 0.0
    %433 = vmatpush1.msra.mxu0 0.0
    %434 = vmatprep.subr.mxu0 0.0
    %435 = vmatpush1.msra.mxu0 0.0
    %436 = vmatprep.subr.mxu0 0.0
    %437 = vmatpush1.msra.mxu0 0.0
    %438 = vmatprep.subr.mxu0 0.0
    %439 = vmatpush1.msra.mxu0 0.0
    %440 = vmatprep.subr.mxu0 0.0
    %441 = vmatpush1.msra.mxu0 0.0
    %442 = vmatprep.subr.mxu0 0.0
    %443 = vmatpush1.msra.mxu0 0.0
    %444 = vmatprep.subr.mxu0 0.0
    %445 = vmatpush1.msra.mxu0 0.0
    %446 = vmatprep.subr.mxu0 0.0
    %447 = vmatpush1.msra.mxu0 0.0
    %448 = vmatprep.subr.mxu0 0.0
    %449 = vmatpush1.msra.mxu0 0.0
    %450 = vmatprep.subr.mxu0 0.0
    %451 = vmatpush1.msra.mxu0 0.0
    %452 = vmatprep.subr.mxu0 0.0
    %453 = vmatpush1.msra.mxu0 0.0
    %454 = vmatprep.subr.mxu0 0.0
    %455 = vmatpush1.msra.mxu0 0.0
    %456 = vmatprep.subr.mxu0 0.0
    %457 = vmatpush1.msra.mxu0 0.0
    %458 = vmatprep.subr.mxu0 0.0
    %459 = vmatpush1.msra.mxu0 0.0
    %460 = vmatprep.subr.mxu0 0.0
    %461 = vmatpush1.msra.mxu0 0.0
    %462 = vmatprep.subr.mxu0 0.0
    %463 = vmatpush1.msra.mxu0 0.0
    %464 = vmatprep.subr.mxu0 0.0
    %465 = vmatpush1.msra.mxu0 0.0
    %466 = vmatprep.subr.mxu0 0.0
    %467 = vmatpush1.msra.mxu0 0.0
    %468 = vmatprep.subr.mxu0 0.0
    %469 = vmatpush1.msra.mxu0 0.0
    %470 = vmatprep.subr.mxu0 0.0
    %471 = vmatpush1.msra.mxu0 0.0
    %472 = vmatprep.subr.mxu0 0.0
    %473 = vmatpush1.msra.mxu0 0.0
    %474 = vmatprep.subr.mxu0 0.0
    %475 = vmatpush1.msra.mxu0 0.0
    %476 = vmatprep.subr.mxu0 0.0
    %477 = vmatpush1.msra.mxu0 0.0
    %478 = vmatprep.subr.mxu0 0.0
    %479 = vmatpush1.msra.mxu0 0.0
    %480 = vmatprep.mubr.f32.mxu0 0.0
    %481 = vmatmul.mubr.f32.gmra.mrb[0].mxu0 %v414
    %v482 = vpop.f32.mrb[0].mxu0
    %v483 = vadd.f32 0.0, %v482
    %v484 = vpop.f32.mrb[0].mxu0
    %485 = vdwg.mxu0
    %v487 = vrot.slane %v483, 6
    %v489 = vadd.f32 %v298, %v487
    %v490 = vxor.u32 %v489, 2147483648
    %v491 = vmul.f32 %v490, 1.442695
    %v492 = vpow.pop %v491
    %v493 = vadd.f32 %v492, 1.0
    %v494 = vrcp.pop %v493
    %v495 = vmul.f32 1.0, %v494
    %v496 = vtanh.pop %v489
    %v498 = vrot.slane %v401, 6
    %v500 = vmul.f32 %v495, %v498
    %502 = vrot.lane.b32.xlu0 %v496, 64
    %v503 = vpop.permute.xlu0 %502
    %v505 = vmul.f32 %v495, %v503
    %507 = vrot.lane.b32.xlu0 %v505, 32
    %v508 = vpop.permute.xlu0 %507
    %v510 = vadd.f32 %v500, %v508
    %v511 = vtanh.pop %v510
    %513 = vrot.lane.b32.xlu0 %v511, 64
    %v514 = vpop.permute.xlu0 %513
    %v516 = vmul.f32 %v495, %v514
    %518 = vrot.lane.b32.xlu0 %v516, 32
    %v519 = vpop.permute.xlu0 %518
    %vm521 = vcmask 257026
    %522 = vst.msk [vmem:[#allocation2] sm:$0xc] %vm521, %v519
    %v523 = vrot.slane %v516, 2
    %524 = vrot.lane.b32.xlu0 %v523, 32
    %v525 = vpop.permute.xlu0 %524
    %v526 = vsel %vm211, %v525, 0
    %528 = vmatprep.subr.mxu0 0.0
    %529 = vmatpush1.msra.mxu0 %v306
    %530 = vmatprep.subr.mxu0 0.0
    %531 = vmatpush1.msra.mxu0 %v307
    %532 = vmatprep.subr.mxu0 0.0
    %533 = vmatpush1.msra.mxu0 %v308
    %534 = vmatprep.subr.mxu0 0.0
    %535 = vmatpush1.msra.mxu0 %v309
    %536 = vmatprep.subr.mxu0 0.0
    %537 = vmatpush1.msra.mxu0 0.0
    %538 = vmatprep.subr.mxu0 0.0
    %539 = vmatpush1.msra.mxu0 0.0
    %540 = vmatprep.subr.mxu0 0.0
    %541 = vmatpush1.msra.mxu0 0.0
    %542 = vmatprep.subr.mxu0 0.0
    %543 = vmatpush1.msra.mxu0 0.0
    %544 = vmatprep.subr.mxu0 0.0
    %545 = vmatpush1.msra.mxu0 0.0
    %546 = vmatprep.subr.mxu0 0.0
    %547 = vmatpush1.msra.mxu0 0.0
    %548 = vmatprep.subr.mxu0 0.0
    %549 = vmatpush1.msra.mxu0 0.0
    %550 = vmatprep.subr.mxu0 0.0
    %551 = vmatpush1.msra.mxu0 0.0
    %552 = vmatprep.subr.mxu0 0.0
    %553 = vmatpush1.msra.mxu0 0.0
    %554 = vmatprep.subr.mxu0 0.0
    %555 = vmatpush1.msra.mxu0 0.0
    %556 = vmatprep.subr.mxu0 0.0
    %557 = vmatpush1.msra.mxu0 0.0
    %558 = vmatprep.subr.mxu0 0.0
    %559 = vmatpush1.msra.mxu0 0.0
    %560 = vmatprep.subr.mxu0 0.0
    %561 = vmatpush1.msra.mxu0 0.0
    %562 = vmatprep.subr.mxu0 0.0
    %563 = vmatpush1.msra.mxu0 0.0
    %564 = vmatprep.subr.mxu0 0.0
    %565 = vmatpush1.msra.mxu0 0.0
    %566 = vmatprep.subr.mxu0 0.0
    %567 = vmatpush1.msra.mxu0 0.0
    %568 = vmatprep.subr.mxu0 0.0
    %569 = vmatpush1.msra.mxu0 0.0
    %570 = vmatprep.subr.mxu0 0.0
    %571 = vmatpush1.msra.mxu0 0.0
    %572 = vmatprep.subr.mxu0 0.0
    %573 = vmatpush1.msra.mxu0 0.0
    %574 = vmatprep.subr.mxu0 0.0
    %575 = vmatpush1.msra.mxu0 0.0
    %576 = vmatprep.subr.mxu0 0.0
    %577 = vmatpush1.msra.mxu0 0.0
    %578 = vmatprep.subr.mxu0 0.0
    %579 = vmatpush1.msra.mxu0 0.0
    %580 = vmatprep.subr.mxu0 0.0
    %581 = vmatpush1.msra.mxu0 0.0
    %582 = vmatprep.subr.mxu0 0.0
    %583 = vmatpush1.msra.mxu0 0.0
    %584 = vmatprep.subr.mxu0 0.0
    %585 = vmatpush1.msra.mxu0 0.0
    %586 = vmatprep.subr.mxu0 0.0
    %587 = vmatpush1.msra.mxu0 0.0
    %588 = vmatprep.subr.mxu0 0.0
    %589 = vmatpush1.msra.mxu0 0.0
    %590 = vmatprep.subr.mxu0 0.0
    %591 = vmatpush1.msra.mxu0 0.0
    %592 = vmatprep.mubr.f32.mxu0 0.0
    %593 = vmatmul.mubr.f32.gmra.mrb[0].mxu0 %v526
    %v594 = vpop.f32.mrb[0].mxu0
    %v595 = vadd.f32 0.0, %v594
    %v596 = vpop.f32.mrb[0].mxu0
    %597 = vdwg.mxu0
    %v599 = vrot.slane %v595, 4
    %v601 = vadd.f32 %v298, %v599
    %v602 = vxor.u32 %v601, 2147483648
    %v603 = vmul.f32 %v602, 1.442695
    %v604 = vpow.pop %v603
    %v605 = vadd.f32 %v604, 1.0
    %v606 = vrcp.pop %v605
    %v607 = vmul.f32 1.0, %v606
    %v608 = vtanh.pop %v601
    %v610 = vrot.slane %v510, 6
    %v612 = vmul.f32 %v607, %v610
    %614 = vrot.lane.b32.xlu0 %v608, 64
    %v615 = vpop.permute.xlu0 %614
    %v617 = vmul.f32 %v607, %v615
    %619 = vrot.lane.b32.xlu0 %v617, 32
    %v620 = vpop.permute.xlu0 %619
    %v622 = vadd.f32 %v612, %v620
    %v623 = vtanh.pop %v622
    %625 = vrot.lane.b32.xlu0 %v623, 64
    %v626 = vpop.permute.xlu0 %625
    %v628 = vmul.f32 %v607, %v626
    %630 = vrot.lane.b32.xlu0 %v628, 32
    %v631 = vpop.permute.xlu0 %630
    %vm633 = vcmask 259076
    %634 = vst.msk [vmem:[#allocation2] sm:$0x30] %vm633, %v631
    %v635 = vrot.slane %v628, 4
    %636 = vrot.lane.b32.xlu0 %v635, 32
    %v637 = vpop.permute.xlu0 %636
    %v638 = vsel %vm211, %v637, 0
    %640 = vmatprep.subr.mxu0 0.0
    %641 = vmatpush1.msra.mxu0 %v306
    %642 = vmatprep.subr.mxu0 0.0
    %643 = vmatpush1.msra.mxu0 %v307
    %644 = vmatprep.subr.mxu0 0.0
    %645 = vmatpush1.msra.mxu0 %v308
    %646 = vmatprep.subr.mxu0 0.0
    %647 = vmatpush1.msra.mxu0 %v309
    %648 = vmatprep.subr.mxu0 0.0
    %649 = vmatpush1.msra.mxu0 0.0
    %650 = vmatprep.subr.mxu0 0.0
    %651 = vmatpush1.msra.mxu0 0.0
    %652 = vmatprep.subr.mxu0 0.0
    %653 = vmatpush1.msra.mxu0 0.0
    %654 = vmatprep.subr.mxu0 0.0
    %655 = vmatpush1.msra.mxu0 0.0
    %656 = vmatprep.subr.mxu0 0.0
    %657 = vmatpush1.msra.mxu0 0.0
    %658 = vmatprep.subr.mxu0 0.0
    %659 = vmatpush1.msra.mxu0 0.0
    %660 = vmatprep.subr.mxu0 0.0
    %661 = vmatpush1.msra.mxu0 0.0
    %662 = vmatprep.subr.mxu0 0.0
    %663 = vmatpush1.msra.mxu0 0.0
    %664 = vmatprep.subr.mxu0 0.0
    %665 = vmatpush1.msra.mxu0 0.0
    %666 = vmatprep.subr.mxu0 0.0
    %667 = vmatpush1.msra.mxu0 0.0
    %668 = vmatprep.subr.mxu0 0.0
    %669 = vmatpush1.msra.mxu0 0.0
    %670 = vmatprep.subr.mxu0 0.0
    %671 = vmatpush1.msra.mxu0 0.0
    %672 = vmatprep.subr.mxu0 0.0
    %673 = vmatpush1.msra.mxu0 0.0
    %674 = vmatprep.subr.mxu0 0.0
    %675 = vmatpush1.msra.mxu0 0.0
    %676 = vmatprep.subr.mxu0 0.0
    %677 = vmatpush1.msra.mxu0 0.0
    %678 = vmatprep.subr.mxu0 0.0
    %679 = vmatpush1.msra.mxu0 0.0
    %680 = vmatprep.subr.mxu0 0.0
    %681 = vmatpush1.msra.mxu0 0.0
    %682 = vmatprep.subr.mxu0 0.0
    %683 = vmatpush1.msra.mxu0 0.0
    %684 = vmatprep.subr.mxu0 0.0
    %685 = vmatpush1.msra.mxu0 0.0
    %686 = vmatprep.subr.mxu0 0.0
    %687 = vmatpush1.msra.mxu0 0.0
    %688 = vmatprep.subr.mxu0 0.0
    %689 = vmatpush1.msra.mxu0 0.0
    %690 = vmatprep.subr.mxu0 0.0
    %691 = vmatpush1.msra.mxu0 0.0
    %692 = vmatprep.subr.mxu0 0.0
    %693 = vmatpush1.msra.mxu0 0.0
    %694 = vmatprep.subr.mxu0 0.0
    %695 = vmatpush1.msra.mxu0 0.0
    %696 = vmatprep.subr.mxu0 0.0
    %697 = vmatpush1.msra.mxu0 0.0
    %698 = vmatprep.subr.mxu0 0.0
    %699 = vmatpush1.msra.mxu0 0.0
    %700 = vmatprep.subr.mxu0 0.0
    %701 = vmatpush1.msra.mxu0 0.0
    %702 = vmatprep.subr.mxu0 0.0
    %703 = vmatpush1.msra.mxu0 0.0
    %704 = vmatprep.mubr.f32.mxu0 0.0
    %705 = vmatmul.mubr.f32.gmra.mrb[0].mxu0 %v638
    %v706 = vpop.f32.mrb[0].mxu0
    %v707 = vadd.f32 0.0, %v706
    %v708 = vpop.f32.mrb[0].mxu0
    %709 = vdwg.mxu0
    %v711 = vrot.slane %v707, 2
    %v713 = vadd.f32 %v298, %v711
    %v714 = vxor.u32 %v713, 2147483648
    %v715 = vmul.f32 %v714, 1.442695
    %v716 = vpow.pop %v715
    %v717 = vadd.f32 %v716, 1.0
    %v718 = vrcp.pop %v717
    %v719 = vmul.f32 1.0, %v718
    %v720 = vtanh.pop %v713
    %v722 = vrot.slane %v622, 6
    %v724 = vmul.f32 %v719, %v722
    %726 = vrot.lane.b32.xlu0 %v720, 64
    %v727 = vpop.permute.xlu0 %726
    %v729 = vmul.f32 %v719, %v727
    %731 = vrot.lane.b32.xlu0 %v729, 32
    %v732 = vpop.permute.xlu0 %731
    %v734 = vadd.f32 %v724, %v732
    %v735 = vtanh.pop %v734
    %737 = vrot.lane.b32.xlu0 %v735, 64
    %v738 = vpop.permute.xlu0 %737
    %v740 = vmul.f32 %v719, %v738
    %742 = vrot.lane.b32.xlu0 %v740, 32
    %v743 = vpop.permute.xlu0 %742
    %vm745 = vcmask 261126
    %746 = vst.msk [vmem:[#allocation2] sm:$0xc0] %vm745, %v743
    %v747 = vrot.slane %v740, 6
    %748 = vrot.lane.b32.xlu0 %v747, 32
    %v749 = vpop.permute.xlu0 %748
    %v750 = vsel %vm211, %v749, 0
    %752 = vmatprep.subr.mxu0 0.0
    %753 = vmatpush1.msra.mxu0 %v306
    %754 = vmatprep.subr.mxu0 0.0
    %755 = vmatpush1.msra.mxu0 %v307
    %756 = vmatprep.subr.mxu0 0.0
    %757 = vmatpush1.msra.mxu0 %v308
    %758 = vmatprep.subr.mxu0 0.0
    %759 = vmatpush1.msra.mxu0 %v309
    %760 = vmatprep.subr.mxu0 0.0
    %761 = vmatpush1.msra.mxu0 0.0
    %762 = vmatprep.subr.mxu0 0.0
    %763 = vmatpush1.msra.mxu0 0.0
    %764 = vmatprep.subr.mxu0 0.0
    %765 = vmatpush1.msra.mxu0 0.0
    %766 = vmatprep.subr.mxu0 0.0
    %767 = vmatpush1.msra.mxu0 0.0
    %768 = vmatprep.subr.mxu0 0.0
    %769 = vmatpush1.msra.mxu0 0.0
    %770 = vmatprep.subr.mxu0 0.0
    %771 = vmatpush1.msra.mxu0 0.0
    %772 = vmatprep.subr.mxu0 0.0
    %773 = vmatpush1.msra.mxu0 0.0
    %774 = vmatprep.subr.mxu0 0.0
    %775 = vmatpush1.msra.mxu0 0.0
    %776 = vmatprep.subr.mxu0 0.0
    %777 = vmatpush1.msra.mxu0 0.0
    %778 = vmatprep.subr.mxu0 0.0
    %779 = vmatpush1.msra.mxu0 0.0
    %780 = vmatprep.subr.mxu0 0.0
    %781 = vmatpush1.msra.mxu0 0.0
    %782 = vmatprep.subr.mxu0 0.0
    %783 = vmatpush1.msra.mxu0 0.0
    %784 = vmatprep.subr.mxu0 0.0
    %785 = vmatpush1.msra.mxu0 0.0
    %786 = vmatprep.subr.mxu0 0.0
    %787 = vmatpush1.msra.mxu0 0.0
    %788 = vmatprep.subr.mxu0 0.0
    %789 = vmatpush1.msra.mxu0 0.0
    %790 = vmatprep.subr.mxu0 0.0
    %791 = vmatpush1.msra.mxu0 0.0
    %792 = vmatprep.subr.mxu0 0.0
    %793 = vmatpush1.msra.mxu0 0.0
    %794 = vmatprep.subr.mxu0 0.0
    %795 = vmatpush1.msra.mxu0 0.0
    %796 = vmatprep.subr.mxu0 0.0
    %797 = vmatpush1.msra.mxu0 0.0
    %798 = vmatprep.subr.mxu0 0.0
    %799 = vmatpush1.msra.mxu0 0.0
    %800 = vmatprep.subr.mxu0 0.0
    %801 = vmatpush1.msra.mxu0 0.0
    %802 = vmatprep.subr.mxu0 0.0
    %803 = vmatpush1.msra.mxu0 0.0
    %804 = vmatprep.subr.mxu0 0.0
    %805 = vmatpush1.msra.mxu0 0.0
    %806 = vmatprep.subr.mxu0 0.0
    %807 = vmatpush1.msra.mxu0 0.0
    %808 = vmatprep.subr.mxu0 0.0
    %809 = vmatpush1.msra.mxu0 0.0
    %810 = vmatprep.subr.mxu0 0.0
    %811 = vmatpush1.msra.mxu0 0.0
    %812 = vmatprep.subr.mxu0 0.0
    %813 = vmatpush1.msra.mxu0 0.0
    %814 = vmatprep.subr.mxu0 0.0
    %815 = vmatpush1.msra.mxu0 0.0
    %816 = vmatprep.mubr.f32.mxu0 0.0
    %817 = vmatmul.mubr.f32.gmra.mrb[0].mxu0 %v750
    %v818 = vpop.f32.mrb[0].mxu0
    %v819 = vadd.f32 0.0, %v818
    %v820 = vpop.f32.mrb[0].mxu0
    %821 = vdwg.mxu0
    %v822 = vadd.f32 %v303, %v819
    %v823 = vxor.u32 %v822, 2147483648
    %v824 = vmul.f32 %v823, 1.442695
    %v825 = vpow.pop %v824
    %v826 = vadd.f32 %v825, 1.0
    %v827 = vrcp.pop %v826
    %v828 = vmul.f32 1.0, %v827
    %v829 = vtanh.pop %v822
    %v831 = vrot.slane %v734, 6
    %v833 = vmul.f32 %v828, %v831
    %835 = vrot.lane.b32.xlu0 %v829, 64
    %v836 = vpop.permute.xlu0 %835
    %v838 = vmul.f32 %v828, %v836
    %840 = vrot.lane.b32.xlu0 %v838, 32
    %v841 = vpop.permute.xlu0 %840
    %v843 = vadd.f32 %v833, %v841
    %v844 = vtanh.pop %v843
    %846 = vrot.lane.b32.xlu0 %v844, 64
    %v847 = vpop.permute.xlu0 %846
    %v849 = vmul.f32 %v828, %v847
    %851 = vrot.lane.b32.xlu0 %v849, 32
    %v852 = vpop.permute.xlu0 %851
    %854 = vst.msk [vmem:[#allocation2 + $0x8] sm:$0x3] %vm412, %v852
    %v855 = vsel %vm211, %v852, 0
    %857 = vmatprep.subr.mxu0 0.0
    %858 = vmatpush1.msra.mxu0 %v306
    %859 = vmatprep.subr.mxu0 0.0
    %860 = vmatpush1.msra.mxu0 %v307
    %861 = vmatprep.subr.mxu0 0.0
    %862 = vmatpush1.msra.mxu0 %v308
    %863 = vmatprep.subr.mxu0 0.0
    %864 = vmatpush1.msra.mxu0 %v309
    %865 = vmatprep.subr.mxu0 0.0
    %866 = vmatpush1.msra.mxu0 0.0
    %867 = vmatprep.subr.mxu0 0.0
    %868 = vmatpush1.msra.mxu0 0.0
    %869 = vmatprep.subr.mxu0 0.0
    %870 = vmatpush1.msra.mxu0 0.0
    %871 = vmatprep.subr.mxu0 0.0
    %872 = vmatpush1.msra.mxu0 0.0
    %873 = vmatprep.subr.mxu0 0.0
    %874 = vmatpush1.msra.mxu0 0.0
    %875 = vmatprep.subr.mxu0 0.0
    %876 = vmatpush1.msra.mxu0 0.0
    %877 = vmatprep.subr.mxu0 0.0
    %878 = vmatpush1.msra.mxu0 0.0
    %879 = vmatprep.subr.mxu0 0.0
    %880 = vmatpush1.msra.mxu0 0.0
    %881 = vmatprep.subr.mxu0 0.0
    %882 = vmatpush1.msra.mxu0 0.0
    %883 = vmatprep.subr.mxu0 0.0
    %884 = vmatpush1.msra.mxu0 0.0
    %885 = vmatprep.subr.mxu0 0.0
    %886 = vmatpush1.msra.mxu0 0.0
    %887 = vmatprep.subr.mxu0 0.0
    %888 = vmatpush1.msra.mxu0 0.0
    %889 = vmatprep.subr.mxu0 0.0
    %890 = vmatpush1.msra.mxu0 0.0
    %891 = vmatprep.subr.mxu0 0.0
    %892 = vmatpush1.msra.mxu0 0.0
    %893 = vmatprep.subr.mxu0 0.0
    %894 = vmatpush1.msra.mxu0 0.0
    %895 = vmatprep.subr.mxu0 0.0
    %896 = vmatpush1.msra.mxu0 0.0
    %897 = vmatprep.subr.mxu0 0.0
    %898 = vmatpush1.msra.mxu0 0.0
    %899 = vmatprep.subr.mxu0 0.0
    %900 = vmatpush1.msra.mxu0 0.0
    %901 = vmatprep.subr.mxu0 0.0
    %902 = vmatpush1.msra.mxu0 0.0
    %903 = vmatprep.subr.mxu0 0.0
    %904 = vmatpush1.msra.mxu0 0.0
    %905 = vmatprep.subr.mxu0 0.0
    %906 = vmatpush1.msra.mxu0 0.0
    %907 = vmatprep.subr.mxu0 0.0
    %908 = vmatpush1.msra.mxu0 0.0
    %909 = vmatprep.subr.mxu0 0.0
    %910 = vmatpush1.msra.mxu0 0.0
    %911 = vmatprep.subr.mxu0 0.0
    %912 = vmatpush1.msra.mxu0 0.0
    %913 = vmatprep.subr.mxu0 0.0
    %914 = vmatpush1.msra.mxu0 0.0
    %915 = vmatprep.subr.mxu0 0.0
    %916 = vmatpush1.msra.mxu0 0.0
    %917 = vmatprep.subr.mxu0 0.0
    %918 = vmatpush1.msra.mxu0 0.0
    %919 = vmatprep.subr.mxu0 0.0
    %920 = vmatpush1.msra.mxu0 0.0
    %921 = vmatprep.mubr.f32.mxu0 0.0
    %922 = vmatmul.mubr.f32.gmra.mrb[0].mxu0 %v855
    %v923 = vpop.f32.mrb[0].mxu0
    %v924 = vadd.f32 0.0, %v923
    %v925 = vpop.f32.mrb[0].mxu0
    %926 = vdwg.mxu0
    %v928 = vrot.slane %v924, 6
    %v930 = vadd.f32 %v303, %v928
    %v931 = vxor.u32 %v930, 2147483648
    %v932 = vmul.f32 %v931, 1.442695
    %v933 = vpow.pop %v932
    %v934 = vadd.f32 %v933, 1.0
    %v935 = vrcp.pop %v934
    %v936 = vmul.f32 1.0, %v935
    %v937 = vtanh.pop %v930
    %v939 = vrot.slane %v843, 6
    %v941 = vmul.f32 %v936, %v939
    %943 = vrot.lane.b32.xlu0 %v937, 64
    %v944 = vpop.permute.xlu0 %943
    %v946 = vmul.f32 %v936, %v944
    %948 = vrot.lane.b32.xlu0 %v946, 32
    %v949 = vpop.permute.xlu0 %948
    %v951 = vadd.f32 %v941, %v949
    %v952 = vtanh.pop %v951
    %954 = vrot.lane.b32.xlu0 %v952, 64
    %v955 = vpop.permute.xlu0 %954
    %v957 = vmul.f32 %v936, %v955
    %959 = vrot.lane.b32.xlu0 %v957, 32
    %v960 = vpop.permute.xlu0 %959
    %962 = vst.msk [vmem:[#allocation2 + $0x8] sm:$0xc] %vm521, %v960
    %v963 = vrot.slane %v957, 2
    %964 = vrot.lane.b32.xlu0 %v963, 32
    %v965 = vpop.permute.xlu0 %964
    %v966 = vsel %vm211, %v965, 0
    %968 = vmatprep.subr.mxu0 0.0
    %969 = vmatpush1.msra.mxu0 %v306
    %970 = vmatprep.subr.mxu0 0.0
    %971 = vmatpush1.msra.mxu0 %v307
    %972 = vmatprep.subr.mxu0 0.0
    %973 = vmatpush1.msra.mxu0 %v308
    %974 = vmatprep.subr.mxu0 0.0
    %975 = vmatpush1.msra.mxu0 %v309
    %976 = vmatprep.subr.mxu0 0.0
    %977 = vmatpush1.msra.mxu0 0.0
    %978 = vmatprep.subr.mxu0 0.0
    %979 = vmatpush1.msra.mxu0 0.0
    %980 = vmatprep.subr.mxu0 0.0
    %981 = vmatpush1.msra.mxu0 0.0
    %982 = vmatprep.subr.mxu0 0.0
    %983 = vmatpush1.msra.mxu0 0.0
    %984 = vmatprep.subr.mxu0 0.0
    %985 = vmatpush1.msra.mxu0 0.0
    %986 = vmatprep.subr.mxu0 0.0
    %987 = vmatpush1.msra.mxu0 0.0
    %988 = vmatprep.subr.mxu0 0.0
    %989 = vmatpush1.msra.mxu0 0.0
    %990 = vmatprep.subr.mxu0 0.0
    %991 = vmatpush1.msra.mxu0 0.0
    %992 = vmatprep.subr.mxu0 0.0
    %993 = vmatpush1.msra.mxu0 0.0
    %994 = vmatprep.subr.mxu0 0.0
    %995 = vmatpush1.msra.mxu0 0.0
    %996 = vmatprep.subr.mxu0 0.0
    %997 = vmatpush1.msra.mxu0 0.0
    %998 = vmatprep.subr.mxu0 0.0
    %999 = vmatpush1.msra.mxu0 0.0
    %1000 = vmatprep.subr.mxu0 0.0
    %1001 = vmatpush1.msra.mxu0 0.0
    %1002 = vmatprep.subr.mxu0 0.0
    %1003 = vmatpush1.msra.mxu0 0.0
    %1004 = vmatprep.subr.mxu0 0.0
    %1005 = vmatpush1.msra.mxu0 0.0
    %1006 = vmatprep.subr.mxu0 0.0
    %1007 = vmatpush1.msra.mxu0 0.0
    %1008 = vmatprep.subr.mxu0 0.0
    %1009 = vmatpush1.msra.mxu0 0.0
    %1010 = vmatprep.subr.mxu0 0.0
    %1011 = vmatpush1.msra.mxu0 0.0
    %1012 = vmatprep.subr.mxu0 0.0
    %1013 = vmatpush1.msra.mxu0 0.0
    %1014 = vmatprep.subr.mxu0 0.0
    %1015 = vmatpush1.msra.mxu0 0.0
    %1016 = vmatprep.subr.mxu0 0.0
    %1017 = vmatpush1.msra.mxu0 0.0
    %1018 = vmatprep.subr.mxu0 0.0
    %1019 = vmatpush1.msra.mxu0 0.0
    %1020 = vmatprep.subr.mxu0 0.0
    %1021 = vmatpush1.msra.mxu0 0.0
    %1022 = vmatprep.subr.mxu0 0.0
    %1023 = vmatpush1.msra.mxu0 0.0
    %1024 = vmatprep.subr.mxu0 0.0
    %1025 = vmatpush1.msra.mxu0 0.0
    %1026 = vmatprep.subr.mxu0 0.0
    %1027 = vmatpush1.msra.mxu0 0.0
    %1028 = vmatprep.subr.mxu0 0.0
    %1029 = vmatpush1.msra.mxu0 0.0
    %1030 = vmatprep.subr.mxu0 0.0
    %1031 = vmatpush1.msra.mxu0 0.0
    %1032 = vmatprep.mubr.f32.mxu0 0.0
    %1033 = vmatmul.mubr.f32.gmra.mrb[0].mxu0 %v966
    %v1034 = vpop.f32.mrb[0].mxu0
    %v1035 = vadd.f32 0.0, %v1034
    %v1036 = vpop.f32.mrb[0].mxu0
    %1037 = vdwg.mxu0
    %v1039 = vrot.slane %v1035, 4
    %v1041 = vadd.f32 %v303, %v1039
    %v1042 = vxor.u32 %v1041, 2147483648
    %v1043 = vmul.f32 %v1042, 1.442695
    %v1044 = vpow.pop %v1043
    %v1045 = vadd.f32 %v1044, 1.0
    %v1046 = vrcp.pop %v1045
    %v1047 = vmul.f32 1.0, %v1046
    %v1048 = vtanh.pop %v1041
    %v1050 = vrot.slane %v951, 6
    %v1052 = vmul.f32 %v1047, %v1050
    %1054 = vrot.lane.b32.xlu0 %v1048, 64
    %v1055 = vpop.permute.xlu0 %1054
    %v1057 = vmul.f32 %v1047, %v1055
    %1059 = vrot.lane.b32.xlu0 %v1057, 32
    %v1060 = vpop.permute.xlu0 %1059
    %v1062 = vadd.f32 %v1052, %v1060
    %v1063 = vtanh.pop %v1062
    %1065 = vrot.lane.b32.xlu0 %v1063, 64
    %v1066 = vpop.permute.xlu0 %1065
    %v1068 = vmul.f32 %v1047, %v1066
    %1070 = vrot.lane.b32.xlu0 %v1068, 32
    %v1071 = vpop.permute.xlu0 %1070
    %1073 = vst.msk [vmem:[#allocation2 + $0x8] sm:$0x30] %vm633, %v1071
    %v1074 = vrot.slane %v1068, 4
    %1075 = vrot.lane.b32.xlu0 %v1074, 32
    %v1076 = vpop.permute.xlu0 %1075
    %v1077 = vsel %vm211, %v1076, 0
    %1079 = vmatprep.subr.mxu0 0.0
    %1080 = vmatpush1.msra.mxu0 %v306
    %1081 = vmatprep.subr.mxu0 0.0
    %1082 = vmatpush1.msra.mxu0 %v307
    %1083 = vmatprep.subr.mxu0 0.0
    %1084 = vmatpush1.msra.mxu0 %v308
    %1085 = vmatprep.subr.mxu0 0.0
    %1086 = vmatpush1.msra.mxu0 %v309
    %1087 = vmatprep.subr.mxu0 0.0
    %1088 = vmatpush1.msra.mxu0 0.0
    %1089 = vmatprep.subr.mxu0 0.0
    %1090 = vmatpush1.msra.mxu0 0.0
    %1091 = vmatprep.subr.mxu0 0.0
    %1092 = vmatpush1.msra.mxu0 0.0
    %1093 = vmatprep.subr.mxu0 0.0
    %1094 = vmatpush1.msra.mxu0 0.0
    %1095 = vmatprep.subr.mxu0 0.0
    %1096 = vmatpush1.msra.mxu0 0.0
    %1097 = vmatprep.subr.mxu0 0.0
    %1098 = vmatpush1.msra.mxu0 0.0
    %1099 = vmatprep.subr.mxu0 0.0
    %1100 = vmatpush1.msra.mxu0 0.0
    %1101 = vmatprep.subr.mxu0 0.0
    %1102 = vmatpush1.msra.mxu0 0.0
    %1103 = vmatprep.subr.mxu0 0.0
    %1104 = vmatpush1.msra.mxu0 0.0
    %1105 = vmatprep.subr.mxu0 0.0
    %1106 = vmatpush1.msra.mxu0 0.0
    %1107 = vmatprep.subr.mxu0 0.0
    %1108 = vmatpush1.msra.mxu0 0.0
    %1109 = vmatprep.subr.mxu0 0.0
    %1110 = vmatpush1.msra.mxu0 0.0
    %1111 = vmatprep.subr.mxu0 0.0
    %1112 = vmatpush1.msra.mxu0 0.0
    %1113 = vmatprep.subr.mxu0 0.0
    %1114 = vmatpush1.msra.mxu0 0.0
    %1115 = vmatprep.subr.mxu0 0.0
    %1116 = vmatpush1.msra.mxu0 0.0
    %1117 = vmatprep.subr.mxu0 0.0
    %1118 = vmatpush1.msra.mxu0 0.0
    %1119 = vmatprep.subr.mxu0 0.0
    %1120 = vmatpush1.msra.mxu0 0.0
    %1121 = vmatprep.subr.mxu0 0.0
    %1122 = vmatpush1.msra.mxu0 0.0
    %1123 = vmatprep.subr.mxu0 0.0
    %1124 = vmatpush1.msra.mxu0 0.0
    %1125 = vmatprep.subr.mxu0 0.0
    %1126 = vmatpush1.msra.mxu0 0.0
    %1127 = vmatprep.subr.mxu0 0.0
    %1128 = vmatpush1.msra.mxu0 0.0
    %1129 = vmatprep.subr.mxu0 0.0
    %1130 = vmatpush1.msra.mxu0 0.0
    %1131 = vmatprep.subr.mxu0 0.0
    %1132 = vmatpush1.msra.mxu0 0.0
    %1133 = vmatprep.subr.mxu0 0.0
    %1134 = vmatpush1.msra.mxu0 0.0
    %1135 = vmatprep.subr.mxu0 0.0
    %1136 = vmatpush1.msra.mxu0 0.0
    %1137 = vmatprep.subr.mxu0 0.0
    %1138 = vmatpush1.msra.mxu0 0.0
    %1139 = vmatprep.subr.mxu0 0.0
    %1140 = vmatpush1.msra.mxu0 0.0
    %1141 = vmatprep.subr.mxu0 0.0
    %1142 = vmatpush1.msra.mxu0 0.0
    %1143 = vmatprep.mubr.f32.mxu0 0.0
    %1144 = vmatmul.mubr.f32.gmra.mrb[0].mxu0 %v1077
    %v1145 = vpop.f32.mrb[0].mxu0
    %v1146 = vadd.f32 0.0, %v1145
    %v1147 = vpop.f32.mrb[0].mxu0
    %1148 = vdwg.mxu0
    %v1150 = vrot.slane %v1146, 2
    %v1152 = vadd.f32 %v303, %v1150
    %v1153 = vxor.u32 %v1152, 2147483648
    %v1154 = vmul.f32 %v1153, 1.442695
    %v1155 = vpow.pop %v1154
    %v1156 = vadd.f32 %v1155, 1.0
    %v1157 = vrcp.pop %v1156
    %v1158 = vmul.f32 1.0, %v1157
    %v1159 = vtanh.pop %v1152
    %v1161 = vrot.slane %v1062, 6
    %v1163 = vmul.f32 %v1158, %v1161
    %1165 = vrot.lane.b32.xlu0 %v1159, 64
    %v1166 = vpop.permute.xlu0 %1165
    %v1168 = vmul.f32 %v1158, %v1166
    %1170 = vrot.lane.b32.xlu0 %v1168, 32
    %v1171 = vpop.permute.xlu0 %1170
    %v1173 = vadd.f32 %v1163, %v1171
    %v1174 = vtanh.pop %v1173
    %1176 = vrot.lane.b32.xlu0 %v1174, 64
    %v1177 = vpop.permute.xlu0 %1176
    %v1179 = vmul.f32 %v1158, %v1177
    %1181 = vrot.lane.b32.xlu0 %v1179, 32
    %v1182 = vpop.permute.xlu0 %1181
    %1184 = vst.msk [vmem:[#allocation2 + $0x8] sm:$0xc0] %vm745, %v1182
    %v1185 = vld [vmem:[#allocation2] sm:$0xff]
    %v1186 = vld [vmem:[#allocation2 + $0x8] sm:$0xff]
    %v1187 = vld [vmem:[%s6] sm:$0xff]
    %v1188 = vld [vmem:[%s6 + $0x8] sm:$0xff]
    %v1189 = vld [vmem:[%s6 + $0x10] sm:$0xff]
    %v1190 = vld [vmem:[%s6 + $0x18] sm:$0xff]
    %v1191 = vld [vmem:[#allocation11] sm:$0x1]
    %v1193 = vlaneseq
    %v1194 = vshrl.u32 %v1193, 7
    %v1195 = vsub.s32 0, %v1194
    %v1196 = vrot.slane %v1191, %v1195
    %v1199 = vsel %vm211, %v1185, 0
    %v1202 = vsel %vm211, %v1186, 0
    %1204 = vmatprep.subr.mxu0 0.0
    %1205 = vmatpush1.msra.mxu0 %v1187
    %1206 = vmatprep.subr.mxu0 0.0
    %1207 = vmatpush1.msra.mxu0 %v1188
    %1208 = vmatprep.subr.mxu0 0.0
    %1209 = vmatpush1.msra.mxu0 %v1189
    %1210 = vmatprep.subr.mxu0 0.0
    %1211 = vmatpush1.msra.mxu0 %v1190
    %1212 = vmatprep.subr.mxu0 0.0
    %1213 = vmatpush1.msra.mxu0 0.0
    %1214 = vmatprep.subr.mxu0 0.0
    %1215 = vmatpush1.msra.mxu0 0.0
    %1216 = vmatprep.subr.mxu0 0.0
    %1217 = vmatpush1.msra.mxu0 0.0
    %1218 = vmatprep.subr.mxu0 0.0
    %1219 = vmatpush1.msra.mxu0 0.0
    %1220 = vmatprep.subr.mxu0 0.0
    %1221 = vmatpush1.msra.mxu0 0.0
    %1222 = vmatprep.subr.mxu0 0.0
    %1223 = vmatpush1.msra.mxu0 0.0
    %1224 = vmatprep.subr.mxu0 0.0
    %1225 = vmatpush1.msra.mxu0 0.0
    %1226 = vmatprep.subr.mxu0 0.0
    %1227 = vmatpush1.msra.mxu0 0.0
    %1228 = vmatprep.subr.mxu0 0.0
    %1229 = vmatpush1.msra.mxu0 0.0
    %1230 = vmatprep.subr.mxu0 0.0
    %1231 = vmatpush1.msra.mxu0 0.0
    %1232 = vmatprep.subr.mxu0 0.0
    %1233 = vmatpush1.msra.mxu0 0.0
    %1234 = vmatprep.subr.mxu0 0.0
    %1235 = vmatpush1.msra.mxu0 0.0
    %1236 = vmatprep.subr.mxu0 0.0
    %1237 = vmatpush1.msra.mxu0 0.0
    %1238 = vmatprep.subr.mxu0 0.0
    %1239 = vmatpush1.msra.mxu0 0.0
    %1240 = vmatprep.subr.mxu0 0.0
    %1241 = vmatpush1.msra.mxu0 0.0
    %1242 = vmatprep.subr.mxu0 0.0
    %1243 = vmatpush1.msra.mxu0 0.0
    %1244 = vmatprep.subr.mxu0 0.0
    %1245 = vmatpush1.msra.mxu0 0.0
    %1246 = vmatprep.subr.mxu0 0.0
    %1247 = vmatpush1.msra.mxu0 0.0
    %1248 = vmatprep.subr.mxu0 0.0
    %1249 = vmatpush1.msra.mxu0 0.0
    %1250 = vmatprep.subr.mxu0 0.0
    %1251 = vmatpush1.msra.mxu0 0.0
    %1252 = vmatprep.subr.mxu0 0.0
    %1253 = vmatpush1.msra.mxu0 0.0
    %1254 = vmatprep.subr.mxu0 0.0
    %1255 = vmatpush1.msra.mxu0 0.0
    %1256 = vmatprep.subr.mxu0 0.0
    %1257 = vmatpush1.msra.mxu0 0.0
    %1258 = vmatprep.subr.mxu0 0.0
    %1259 = vmatpush1.msra.mxu0 0.0
    %1260 = vmatprep.subr.mxu0 0.0
    %1261 = vmatpush1.msra.mxu0 0.0
    %1262 = vmatprep.subr.mxu0 0.0
    %1263 = vmatpush1.msra.mxu0 0.0
    %1264 = vmatprep.subr.mxu0 0.0
    %1265 = vmatpush1.msra.mxu0 0.0
    %1266 = vmatprep.subr.mxu0 0.0
    %1267 = vmatpush1.msra.mxu0 0.0
    %1268 = vmatprep.mubr.f32.mxu0 0.0
    %1269 = vmatmul.mubr.f32.gmra.mrb[0].mxu0 %v1199
    %v1270 = vpop.f32.mrb[0].mxu0
    %v1271 = vadd.f32 %v1196, %v1270
    %v1272 = vpop.f32.mrb[0].mxu0
    %1273 = vmatprep.mubr.f32.mxu0 0.0
    %1274 = vmatmul.mubr.f32.gmra.mrb[0].mxu0 %v1202
    %v1275 = vpop.f32.mrb[0].mxu0
    %v1276 = vadd.f32 %v1196, %v1275
    %v1277 = vpop.f32.mrb[0].mxu0
    %1278 = vdwg.mxu0
    %v1279 = vld [vmem:[#allocation9] sm:$0xff]
    %v1280 = vld [vmem:[#allocation9 + $0x8] sm:$0xff]
    %v1281 = vld [vmem:[#allocation9 + $0x10] sm:$0xff]
    %v1282 = vld [vmem:[#allocation9 + $0x18] sm:$0xff]
    %1283 = vmatprep.subr.mxu0 0.0
    %1284 = vmatpush1.msra.mxu0 %v1279
    %1285 = vmatprep.subr.mxu0 0.0
    %1286 = vmatpush1.msra.mxu0 %v1280
    %1287 = vmatprep.subr.mxu0 0.0
    %1288 = vmatpush1.msra.mxu0 %v1281
    %1289 = vmatprep.subr.mxu0 0.0
    %1290 = vmatpush1.msra.mxu0 %v1282
    %1291 = vmatprep.subr.mxu0 0.0
    %1292 = vmatpush1.msra.mxu0 0.0
    %1293 = vmatprep.subr.mxu0 0.0
    %1294 = vmatpush1.msra.mxu0 0.0
    %1295 = vmatprep.subr.mxu0 0.0
    %1296 = vmatpush1.msra.mxu0 0.0
    %1297 = vmatprep.subr.mxu0 0.0
    %1298 = vmatpush1.msra.mxu0 0.0
    %1299 = vmatprep.subr.mxu0 0.0
    %1300 = vmatpush1.msra.mxu0 0.0
    %1301 = vmatprep.subr.mxu0 0.0
    %1302 = vmatpush1.msra.mxu0 0.0
    %1303 = vmatprep.subr.mxu0 0.0
    %1304 = vmatpush1.msra.mxu0 0.0
    %1305 = vmatprep.subr.mxu0 0.0
    %1306 = vmatpush1.msra.mxu0 0.0
    %1307 = vmatprep.subr.mxu0 0.0
    %1308 = vmatpush1.msra.mxu0 0.0
    %1309 = vmatprep.subr.mxu0 0.0
    %1310 = vmatpush1.msra.mxu0 0.0
    %1311 = vmatprep.subr.mxu0 0.0
    %1312 = vmatpush1.msra.mxu0 0.0
    %1313 = vmatprep.subr.mxu0 0.0
    %1314 = vmatpush1.msra.mxu0 0.0
    %1315 = vmatprep.subr.mxu0 0.0
    %1316 = vmatpush1.msra.mxu0 0.0
    %1317 = vmatprep.subr.mxu0 0.0
    %1318 = vmatpush1.msra.mxu0 0.0
    %1319 = vmatprep.subr.mxu0 0.0
    %1320 = vmatpush1.msra.mxu0 0.0
    %1321 = vmatprep.subr.mxu0 0.0
    %1322 = vmatpush1.msra.mxu0 0.0
    %1323 = vmatprep.subr.mxu0 0.0
    %1324 = vmatpush1.msra.mxu0 0.0
    %1325 = vmatprep.subr.mxu0 0.0
    %1326 = vmatpush1.msra.mxu0 0.0
    %1327 = vmatprep.subr.mxu0 0.0
    %1328 = vmatpush1.msra.mxu0 0.0
    %1329 = vmatprep.subr.mxu0 0.0
    %1330 = vmatpush1.msra.mxu0 0.0
    %1331 = vmatprep.subr.mxu0 0.0
    %1332 = vmatpush1.msra.mxu0 0.0
    %1333 = vmatprep.subr.mxu0 0.0
    %1334 = vmatpush1.msra.mxu0 0.0
    %1335 = vmatprep.subr.mxu0 0.0
    %1336 = vmatpush1.msra.mxu0 0.0
    %1337 = vmatprep.subr.mxu0 0.0
    %1338 = vmatpush1.msra.mxu0 0.0
    %1339 = vmatprep.subr.mxu0 0.0
    %1340 = vmatpush1.msra.mxu0 0.0
    %1341 = vmatprep.subr.mxu0 0.0
    %1342 = vmatpush1.msra.mxu0 0.0
    %1343 = vmatprep.subr.mxu0 0.0
    %1344 = vmatpush1.msra.mxu0 0.0
    %1345 = vmatprep.subr.mxu0 0.0
    %1346 = vmatpush1.msra.mxu0 0.0
    %1347 = vmatprep.mubr.f32.mxu0 0.0
    %1348 = vmatmul.mubr.f32.gmra.mrb[0].mxu0 %v311
    %v1349 = vpop.f32.mrb[0].mxu0
    %v1350 = vadd.f32 0.0, %v1349
    %v1351 = vpop.f32.mrb[0].mxu0
    %1352 = vdwg.mxu0
    %v1353 = vadd.f32 %v1271, %v1350
    %v1354 = vxor.u32 %v1353, 2147483648
    %v1355 = vmul.f32 %v1354, 1.442695
    %v1356 = vpow.pop %v1355
    %v1357 = vadd.f32 %v1356, 1.0
    %v1358 = vrcp.pop %v1357
    %v1359 = vmul.f32 1.0, %v1358
    %v1360 = vtanh.pop %v1353
    %v1361 = vmul.f32 %v1359, 0.0
    %1363 = vrot.lane.b32.xlu0 %v1360, 64
    %v1364 = vpop.permute.xlu0 %1363
    %v1366 = vmul.f32 %v1359, %v1364
    %1368 = vrot.lane.b32.xlu0 %v1366, 32
    %v1369 = vpop.permute.xlu0 %1368
    %v1371 = vadd.f32 %v1361, %v1369
    %v1372 = vtanh.pop %v1371
    %1374 = vrot.lane.b32.xlu0 %v1372, 64
    %v1375 = vpop.permute.xlu0 %1374
    %v1377 = vmul.f32 %v1359, %v1375
    %1379 = vrot.lane.b32.xlu0 %v1377, 32
    %v1380 = vpop.permute.xlu0 %1379
    %1382 = vst.msk [vmem:[#allocation2] sm:$0x3] %vm412, %v1380
    %v1383 = vsel %vm211, %v1380, 0
    %1385 = vmatprep.subr.mxu0 0.0
    %1386 = vmatpush1.msra.mxu0 %v1279
    %1387 = vmatprep.subr.mxu0 0.0
    %1388 = vmatpush1.msra.mxu0 %v1280
    %1389 = vmatprep.subr.mxu0 0.0
    %1390 = vmatpush1.msra.mxu0 %v1281
    %1391 = vmatprep.subr.mxu0 0.0
    %1392 = vmatpush1.msra.mxu0 %v1282
    %1393 = vmatprep.subr.mxu0 0.0
    %1394 = vmatpush1.msra.mxu0 0.0
    %1395 = vmatprep.subr.mxu0 0.0
    %1396 = vmatpush1.msra.mxu0 0.0
    %1397 = vmatprep.subr.mxu0 0.0
    %1398 = vmatpush1.msra.mxu0 0.0
    %1399 = vmatprep.subr.mxu0 0.0
    %1400 = vmatpush1.msra.mxu0 0.0
    %1401 = vmatprep.subr.mxu0 0.0
    %1402 = vmatpush1.msra.mxu0 0.0
    %1403 = vmatprep.subr.mxu0 0.0
    %1404 = vmatpush1.msra.mxu0 0.0
    %1405 = vmatprep.subr.mxu0 0.0
    %1406 = vmatpush1.msra.mxu0 0.0
    %1407 = vmatprep.subr.mxu0 0.0
    %1408 = vmatpush1.msra.mxu0 0.0
    %1409 = vmatprep.subr.mxu0 0.0
    %1410 = vmatpush1.msra.mxu0 0.0
    %1411 = vmatprep.subr.mxu0 0.0
    %1412 = vmatpush1.msra.mxu0 0.0
    %1413 = vmatprep.subr.mxu0 0.0
    %1414 = vmatpush1.msra.mxu0 0.0
    %1415 = vmatprep.subr.mxu0 0.0
    %1416 = vmatpush1.msra.mxu0 0.0
    %1417 = vmatprep.subr.mxu0 0.0
    %1418 = vmatpush1.msra.mxu0 0.0
    %1419 = vmatprep.subr.mxu0 0.0
    %1420 = vmatpush1.msra.mxu0 0.0
    %1421 = vmatprep.subr.mxu0 0.0
    %1422 = vmatpush1.msra.mxu0 0.0
    %1423 = vmatprep.subr.mxu0 0.0
    %1424 = vmatpush1.msra.mxu0 0.0
    %1425 = vmatprep.subr.mxu0 0.0
    %1426 = vmatpush1.msra.mxu0 0.0
    %1427 = vmatprep.subr.mxu0 0.0
    %1428 = vmatpush1.msra.mxu0 0.0
    %1429 = vmatprep.subr.mxu0 0.0
    %1430 = vmatpush1.msra.mxu0 0.0
    %1431 = vmatprep.subr.mxu0 0.0
    %1432 = vmatpush1.msra.mxu0 0.0
    %1433 = vmatprep.subr.mxu0 0.0
    %1434 = vmatpush1.msra.mxu0 0.0
    %1435 = vmatprep.subr.mxu0 0.0
    %1436 = vmatpush1.msra.mxu0 0.0
    %1437 = vmatprep.subr.mxu0 0.0
    %1438 = vmatpush1.msra.mxu0 0.0
    %1439 = vmatprep.subr.mxu0 0.0
    %1440 = vmatpush1.msra.mxu0 0.0
    %1441 = vmatprep.subr.mxu0 0.0
    %1442 = vmatpush1.msra.mxu0 0.0
    %1443 = vmatprep.subr.mxu0 0.0
    %1444 = vmatpush1.msra.mxu0 0.0
    %1445 = vmatprep.subr.mxu0 0.0
    %1446 = vmatpush1.msra.mxu0 0.0
    %1447 = vmatprep.subr.mxu0 0.0
    %1448 = vmatpush1.msra.mxu0 0.0
    %1449 = vmatprep.mubr.f32.mxu0 0.0
    %1450 = vmatmul.mubr.f32.gmra.mrb[0].mxu0 %v1383
    %v1451 = vpop.f32.mrb[0].mxu0
    %v1452 = vadd.f32 0.0, %v1451
    %v1453 = vpop.f32.mrb[0].mxu0
    %1454 = vdwg.mxu0
    %v1456 = vrot.slane %v1452, 6
    %v1458 = vadd.f32 %v1271, %v1456
    %v1459 = vxor.u32 %v1458, 2147483648
    %v1460 = vmul.f32 %v1459, 1.442695
    %v1461 = vpow.pop %v1460
    %v1462 = vadd.f32 %v1461, 1.0
    %v1463 = vrcp.pop %v1462
    %v1464 = vmul.f32 1.0, %v1463
    %v1465 = vtanh.pop %v1458
    %v1467 = vrot.slane %v1371, 6
    %v1469 = vmul.f32 %v1464, %v1467
    %1471 = vrot.lane.b32.xlu0 %v1465, 64
    %v1472 = vpop.permute.xlu0 %1471
    %v1474 = vmul.f32 %v1464, %v1472
    %1476 = vrot.lane.b32.xlu0 %v1474, 32
    %v1477 = vpop.permute.xlu0 %1476
    %v1479 = vadd.f32 %v1469, %v1477
    %v1480 = vtanh.pop %v1479
    %1482 = vrot.lane.b32.xlu0 %v1480, 64
    %v1483 = vpop.permute.xlu0 %1482
    %v1485 = vmul.f32 %v1464, %v1483
    %1487 = vrot.lane.b32.xlu0 %v1485, 32
    %v1488 = vpop.permute.xlu0 %1487
    %1490 = vst.msk [vmem:[#allocation2] sm:$0xc] %vm521, %v1488
    %v1491 = vrot.slane %v1485, 2
    %1492 = vrot.lane.b32.xlu0 %v1491, 32
    %v1493 = vpop.permute.xlu0 %1492
    %v1494 = vsel %vm211, %v1493, 0
    %1496 = vmatprep.subr.mxu0 0.0
    %1497 = vmatpush1.msra.mxu0 %v1279
    %1498 = vmatprep.subr.mxu0 0.0
    %1499 = vmatpush1.msra.mxu0 %v1280
    %1500 = vmatprep.subr.mxu0 0.0
    %1501 = vmatpush1.msra.mxu0 %v1281
    %1502 = vmatprep.subr.mxu0 0.0
    %1503 = vmatpush1.msra.mxu0 %v1282
    %1504 = vmatprep.subr.mxu0 0.0
    %1505 = vmatpush1.msra.mxu0 0.0
    %1506 = vmatprep.subr.mxu0 0.0
    %1507 = vmatpush1.msra.mxu0 0.0
    %1508 = vmatprep.subr.mxu0 0.0
    %1509 = vmatpush1.msra.mxu0 0.0
    %1510 = vmatprep.subr.mxu0 0.0
    %1511 = vmatpush1.msra.mxu0 0.0
    %1512 = vmatprep.subr.mxu0 0.0
    %1513 = vmatpush1.msra.mxu0 0.0
    %1514 = vmatprep.subr.mxu0 0.0
    %1515 = vmatpush1.msra.mxu0 0.0
    %1516 = vmatprep.subr.mxu0 0.0
    %1517 = vmatpush1.msra.mxu0 0.0
    %1518 = vmatprep.subr.mxu0 0.0
    %1519 = vmatpush1.msra.mxu0 0.0
    %1520 = vmatprep.subr.mxu0 0.0
    %1521 = vmatpush1.msra.mxu0 0.0
    %1522 = vmatprep.subr.mxu0 0.0
    %1523 = vmatpush1.msra.mxu0 0.0
    %1524 = vmatprep.subr.mxu0 0.0
    %1525 = vmatpush1.msra.mxu0 0.0
    %1526 = vmatprep.subr.mxu0 0.0
    %1527 = vmatpush1.msra.mxu0 0.0
    %1528 = vmatprep.subr.mxu0 0.0
    %1529 = vmatpush1.msra.mxu0 0.0
    %1530 = vmatprep.subr.mxu0 0.0
    %1531 = vmatpush1.msra.mxu0 0.0
    %1532 = vmatprep.subr.mxu0 0.0
    %1533 = vmatpush1.msra.mxu0 0.0
    %1534 = vmatprep.subr.mxu0 0.0
    %1535 = vmatpush1.msra.mxu0 0.0
    %1536 = vmatprep.subr.mxu0 0.0
    %1537 = vmatpush1.msra.mxu0 0.0
    %1538 = vmatprep.subr.mxu0 0.0
    %1539 = vmatpush1.msra.mxu0 0.0
    %1540 = vmatprep.subr.mxu0 0.0
    %1541 = vmatpush1.msra.mxu0 0.0
    %1542 = vmatprep.subr.mxu0 0.0
    %1543 = vmatpush1.msra.mxu0 0.0
    %1544 = vmatprep.subr.mxu0 0.0
    %1545 = vmatpush1.msra.mxu0 0.0
    %1546 = vmatprep.subr.mxu0 0.0
    %1547 = vmatpush1.msra.mxu0 0.0
    %1548 = vmatprep.subr.mxu0 0.0
    %1549 = vmatpush1.msra.mxu0 0.0
    %1550 = vmatprep.subr.mxu0 0.0
    %1551 = vmatpush1.msra.mxu0 0.0
    %1552 = vmatprep.subr.mxu0 0.0
    %1553 = vmatpush1.msra.mxu0 0.0
    %1554 = vmatprep.subr.mxu0 0.0
    %1555 = vmatpush1.msra.mxu0 0.0
    %1556 = vmatprep.subr.mxu0 0.0
    %1557 = vmatpush1.msra.mxu0 0.0
    %1558 = vmatprep.subr.mxu0 0.0
    %1559 = vmatpush1.msra.mxu0 0.0
    %1560 = vmatprep.mubr.f32.mxu0 0.0
    %1561 = vmatmul.mubr.f32.gmra.mrb[0].mxu0 %v1494
    %v1562 = vpop.f32.mrb[0].mxu0
    %v1563 = vadd.f32 0.0, %v1562
    %v1564 = vpop.f32.mrb[0].mxu0
    %1565 = vdwg.mxu0
    %v1567 = vrot.slane %v1563, 4
    %v1569 = vadd.f32 %v1271, %v1567
    %v1570 = vxor.u32 %v1569, 2147483648
    %v1571 = vmul.f32 %v1570, 1.442695
    %v1572 = vpow.pop %v1571
    %v1573 = vadd.f32 %v1572, 1.0
    %v1574 = vrcp.pop %v1573
    %v1575 = vmul.f32 1.0, %v1574
    %v1576 = vtanh.pop %v1569
    %v1578 = vrot.slane %v1479, 6
    %v1580 = vmul.f32 %v1575, %v1578
    %1582 = vrot.lane.b32.xlu0 %v1576, 64
    %v1583 = vpop.permute.xlu0 %1582
    %v1585 = vmul.f32 %v1575, %v1583
    %1587 = vrot.lane.b32.xlu0 %v1585, 32
    %v1588 = vpop.permute.xlu0 %1587
    %v1590 = vadd.f32 %v1580, %v1588
    %v1591 = vtanh.pop %v1590
    %1593 = vrot.lane.b32.xlu0 %v1591, 64
    %v1594 = vpop.permute.xlu0 %1593
    %v1596 = vmul.f32 %v1575, %v1594
    %1598 = vrot.lane.b32.xlu0 %v1596, 32
    %v1599 = vpop.permute.xlu0 %1598
    %1601 = vst.msk [vmem:[#allocation2] sm:$0x30] %vm633, %v1599
    %v1602 = vrot.slane %v1596, 4
    %1603 = vrot.lane.b32.xlu0 %v1602, 32
    %v1604 = vpop.permute.xlu0 %1603
    %v1605 = vsel %vm211, %v1604, 0
    %1607 = vmatprep.subr.mxu0 0.0
    %1608 = vmatpush1.msra.mxu0 %v1279
    %1609 = vmatprep.subr.mxu0 0.0
    %1610 = vmatpush1.msra.mxu0 %v1280
    %1611 = vmatprep.subr.mxu0 0.0
    %1612 = vmatpush1.msra.mxu0 %v1281
    %1613 = vmatprep.subr.mxu0 0.0
    %1614 = vmatpush1.msra.mxu0 %v1282
    %1615 = vmatprep.subr.mxu0 0.0
    %1616 = vmatpush1.msra.mxu0 0.0
    %1617 = vmatprep.subr.mxu0 0.0
    %1618 = vmatpush1.msra.mxu0 0.0
    %1619 = vmatprep.subr.mxu0 0.0
    %1620 = vmatpush1.msra.mxu0 0.0
    %1621 = vmatprep.subr.mxu0 0.0
    %1622 = vmatpush1.msra.mxu0 0.0
    %1623 = vmatprep.subr.mxu0 0.0
    %1624 = vmatpush1.msra.mxu0 0.0
    %1625 = vmatprep.subr.mxu0 0.0
    %1626 = vmatpush1.msra.mxu0 0.0
    %1627 = vmatprep.subr.mxu0 0.0
    %1628 = vmatpush1.msra.mxu0 0.0
    %1629 = vmatprep.subr.mxu0 0.0
    %1630 = vmatpush1.msra.mxu0 0.0
    %1631 = vmatprep.subr.mxu0 0.0
    %1632 = vmatpush1.msra.mxu0 0.0
    %1633 = vmatprep.subr.mxu0 0.0
    %1634 = vmatpush1.msra.mxu0 0.0
    %1635 = vmatprep.subr.mxu0 0.0
    %1636 = vmatpush1.msra.mxu0 0.0
    %1637 = vmatprep.subr.mxu0 0.0
    %1638 = vmatpush1.msra.mxu0 0.0
    %1639 = vmatprep.subr.mxu0 0.0
    %1640 = vmatpush1.msra.mxu0 0.0
    %1641 = vmatprep.subr.mxu0 0.0
    %1642 = vmatpush1.msra.mxu0 0.0
    %1643 = vmatprep.subr.mxu0 0.0
    %1644 = vmatpush1.msra.mxu0 0.0
    %1645 = vmatprep.subr.mxu0 0.0
    %1646 = vmatpush1.msra.mxu0 0.0
    %1647 = vmatprep.subr.mxu0 0.0
    %1648 = vmatpush1.msra.mxu0 0.0
    %1649 = vmatprep.subr.mxu0 0.0
    %1650 = vmatpush1.msra.mxu0 0.0
    %1651 = vmatprep.subr.mxu0 0.0
    %1652 = vmatpush1.msra.mxu0 0.0
    %1653 = vmatprep.subr.mxu0 0.0
    %1654 = vmatpush1.msra.mxu0 0.0
    %1655 = vmatprep.subr.mxu0 0.0
    %1656 = vmatpush1.msra.mxu0 0.0
    %1657 = vmatprep.subr.mxu0 0.0
    %1658 = vmatpush1.msra.mxu0 0.0
    %1659 = vmatprep.subr.mxu0 0.0
    %1660 = vmatpush1.msra.mxu0 0.0
    %1661 = vmatprep.subr.mxu0 0.0
    %1662 = vmatpush1.msra.mxu0 0.0
    %1663 = vmatprep.subr.mxu0 0.0
    %1664 = vmatpush1.msra.mxu0 0.0
    %1665 = vmatprep.subr.mxu0 0.0
    %1666 = vmatpush1.msra.mxu0 0.0
    %1667 = vmatprep.subr.mxu0 0.0
    %1668 = vmatpush1.msra.mxu0 0.0
    %1669 = vmatprep.subr.mxu0 0.0
    %1670 = vmatpush1.msra.mxu0 0.0
    %1671 = vmatprep.mubr.f32.mxu0 0.0
    %1672 = vmatmul.mubr.f32.gmra.mrb[0].mxu0 %v1605
    %v1673 = vpop.f32.mrb[0].mxu0
    %v1674 = vadd.f32 0.0, %v1673
    %v1675 = vpop.f32.mrb[0].mxu0
    %1676 = vdwg.mxu0
    %v1678 = vrot.slane %v1674, 2
    %v1680 = vadd.f32 %v1271, %v1678
    %v1681 = vxor.u32 %v1680, 2147483648
    %v1682 = vmul.f32 %v1681, 1.442695
    %v1683 = vpow.pop %v1682
    %v1684 = vadd.f32 %v1683, 1.0
    %v1685 = vrcp.pop %v1684
    %v1686 = vmul.f32 1.0, %v1685
    %v1687 = vtanh.pop %v1680
    %v1689 = vrot.slane %v1590, 6
    %v1691 = vmul.f32 %v1686, %v1689
    %1693 = vrot.lane.b32.xlu0 %v1687, 64
    %v1694 = vpop.permute.xlu0 %1693
    %v1696 = vmul.f32 %v1686, %v1694
    %1698 = vrot.lane.b32.xlu0 %v1696, 32
    %v1699 = vpop.permute.xlu0 %1698
    %v1701 = vadd.f32 %v1691, %v1699
    %v1702 = vtanh.pop %v1701
    %1704 = vrot.lane.b32.xlu0 %v1702, 64
    %v1705 = vpop.permute.xlu0 %1704
    %v1707 = vmul.f32 %v1686, %v1705
    %1709 = vrot.lane.b32.xlu0 %v1707, 32
    %v1710 = vpop.permute.xlu0 %1709
    %1712 = vst.msk [vmem:[#allocation2] sm:$0xc0] %vm745, %v1710
    %v1713 = vrot.slane %v1707, 6
    %1714 = vrot.lane.b32.xlu0 %v1713, 32
    %v1715 = vpop.permute.xlu0 %1714
    %v1716 = vsel %vm211, %v1715, 0
    %1718 = vmatprep.subr.mxu0 0.0
    %1719 = vmatpush1.msra.mxu0 %v1279
    %1720 = vmatprep.subr.mxu0 0.0
    %1721 = vmatpush1.msra.mxu0 %v1280
    %1722 = vmatprep.subr.mxu0 0.0
    %1723 = vmatpush1.msra.mxu0 %v1281
    %1724 = vmatprep.subr.mxu0 0.0
    %1725 = vmatpush1.msra.mxu0 %v1282
    %1726 = vmatprep.subr.mxu0 0.0
    %1727 = vmatpush1.msra.mxu0 0.0
    %1728 = vmatprep.subr.mxu0 0.0
    %1729 = vmatpush1.msra.mxu0 0.0
    %1730 = vmatprep.subr.mxu0 0.0
    %1731 = vmatpush1.msra.mxu0 0.0
    %1732 = vmatprep.subr.mxu0 0.0
    %1733 = vmatpush1.msra.mxu0 0.0
    %1734 = vmatprep.subr.mxu0 0.0
    %1735 = vmatpush1.msra.mxu0 0.0
    %1736 = vmatprep.subr.mxu0 0.0
    %1737 = vmatpush1.msra.mxu0 0.0
    %1738 = vmatprep.subr.mxu0 0.0
    %1739 = vmatpush1.msra.mxu0 0.0
    %1740 = vmatprep.subr.mxu0 0.0
    %1741 = vmatpush1.msra.mxu0 0.0
    %1742 = vmatprep.subr.mxu0 0.0
    %1743 = vmatpush1.msra.mxu0 0.0
    %1744 = vmatprep.subr.mxu0 0.0
    %1745 = vmatpush1.msra.mxu0 0.0
    %1746 = vmatprep.subr.mxu0 0.0
    %1747 = vmatpush1.msra.mxu0 0.0
    %1748 = vmatprep.subr.mxu0 0.0
    %1749 = vmatpush1.msra.mxu0 0.0
    %1750 = vmatprep.subr.mxu0 0.0
    %1751 = vmatpush1.msra.mxu0 0.0
    %1752 = vmatprep.subr.mxu0 0.0
    %1753 = vmatpush1.msra.mxu0 0.0
    %1754 = vmatprep.subr.mxu0 0.0
    %1755 = vmatpush1.msra.mxu0 0.0
    %1756 = vmatprep.subr.mxu0 0.0
    %1757 = vmatpush1.msra.mxu0 0.0
    %1758 = vmatprep.subr.mxu0 0.0
    %1759 = vmatpush1.msra.mxu0 0.0
    %1760 = vmatprep.subr.mxu0 0.0
    %1761 = vmatpush1.msra.mxu0 0.0
    %1762 = vmatprep.subr.mxu0 0.0
    %1763 = vmatpush1.msra.mxu0 0.0
    %1764 = vmatprep.subr.mxu0 0.0
    %1765 = vmatpush1.msra.mxu0 0.0
    %1766 = vmatprep.subr.mxu0 0.0
    %1767 = vmatpush1.msra.mxu0 0.0
    %1768 = vmatprep.subr.mxu0 0.0
    %1769 = vmatpush1.msra.mxu0 0.0
    %1770 = vmatprep.subr.mxu0 0.0
    %1771 = vmatpush1.msra.mxu0 0.0
    %1772 = vmatprep.subr.mxu0 0.0
    %1773 = vmatpush1.msra.mxu0 0.0
    %1774 = vmatprep.subr.mxu0 0.0
    %1775 = vmatpush1.msra.mxu0 0.0
    %1776 = vmatprep.subr.mxu0 0.0
    %1777 = vmatpush1.msra.mxu0 0.0
    %1778 = vmatprep.subr.mxu0 0.0
    %1779 = vmatpush1.msra.mxu0 0.0
    %1780 = vmatprep.subr.mxu0 0.0
    %1781 = vmatpush1.msra.mxu0 0.0
    %1782 = vmatprep.mubr.f32.mxu0 0.0
    %1783 = vmatmul.mubr.f32.gmra.mrb[0].mxu0 %v1716
    %v1784 = vpop.f32.mrb[0].mxu0
    %v1785 = vadd.f32 0.0, %v1784
    %v1786 = vpop.f32.mrb[0].mxu0
    %1787 = vdwg.mxu0
    %v1788 = vadd.f32 %v1276, %v1785
    %v1789 = vxor.u32 %v1788, 2147483648
    %v1790 = vmul.f32 %v1789, 1.442695
    %v1791 = vpow.pop %v1790
    %v1792 = vadd.f32 %v1791, 1.0
    %v1793 = vrcp.pop %v1792
    %v1794 = vmul.f32 1.0, %v1793
    %v1795 = vtanh.pop %v1788
    %v1797 = vrot.slane %v1701, 6
    %v1799 = vmul.f32 %v1794, %v1797
    %1801 = vrot.lane.b32.xlu0 %v1795, 64
    %v1802 = vpop.permute.xlu0 %1801
    %v1804 = vmul.f32 %v1794, %v1802
    %1806 = vrot.lane.b32.xlu0 %v1804, 32
    %v1807 = vpop.permute.xlu0 %1806
    %v1809 = vadd.f32 %v1799, %v1807
    %v1810 = vtanh.pop %v1809
    %1812 = vrot.lane.b32.xlu0 %v1810, 64
    %v1813 = vpop.permute.xlu0 %1812
    %v1815 = vmul.f32 %v1794, %v1813
    %1817 = vrot.lane.b32.xlu0 %v1815, 32
    %v1818 = vpop.permute.xlu0 %1817
    %1820 = vst.msk [vmem:[#allocation2 + $0x8] sm:$0x3] %vm412, %v1818
    %v1821 = vsel %vm211, %v1818, 0
    %1823 = vmatprep.subr.mxu0 0.0
    %1824 = vmatpush1.msra.mxu0 %v1279
    %1825 = vmatprep.subr.mxu0 0.0
    %1826 = vmatpush1.msra.mxu0 %v1280
    %1827 = vmatprep.subr.mxu0 0.0
    %1828 = vmatpush1.msra.mxu0 %v1281
    %1829 = vmatprep.subr.mxu0 0.0
    %1830 = vmatpush1.msra.mxu0 %v1282
    %1831 = vmatprep.subr.mxu0 0.0
    %1832 = vmatpush1.msra.mxu0 0.0
    %1833 = vmatprep.subr.mxu0 0.0
    %1834 = vmatpush1.msra.mxu0 0.0
    %1835 = vmatprep.subr.mxu0 0.0
    %1836 = vmatpush1.msra.mxu0 0.0
    %1837 = vmatprep.subr.mxu0 0.0
    %1838 = vmatpush1.msra.mxu0 0.0
    %1839 = vmatprep.subr.mxu0 0.0
    %1840 = vmatpush1.msra.mxu0 0.0
    %1841 = vmatprep.subr.mxu0 0.0
    %1842 = vmatpush1.msra.mxu0 0.0
    %1843 = vmatprep.subr.mxu0 0.0
    %1844 = vmatpush1.msra.mxu0 0.0
    %1845 = vmatprep.subr.mxu0 0.0
    %1846 = vmatpush1.msra.mxu0 0.0
    %1847 = vmatprep.subr.mxu0 0.0
    %1848 = vmatpush1.msra.mxu0 0.0
    %1849 = vmatprep.subr.mxu0 0.0
    %1850 = vmatpush1.msra.mxu0 0.0
    %1851 = vmatprep.subr.mxu0 0.0
    %1852 = vmatpush1.msra.mxu0 0.0
    %1853 = vmatprep.subr.mxu0 0.0
    %1854 = vmatpush1.msra.mxu0 0.0
    %1855 = vmatprep.subr.mxu0 0.0
    %1856 = vmatpush1.msra.mxu0 0.0
    %1857 = vmatprep.subr.mxu0 0.0
    %1858 = vmatpush1.msra.mxu0 0.0
    %1859 = vmatprep.subr.mxu0 0.0
    %1860 = vmatpush1.msra.mxu0 0.0
    %1861 = vmatprep.subr.mxu0 0.0
    %1862 = vmatpush1.msra.mxu0 0.0
    %1863 = vmatprep.subr.mxu0 0.0
    %1864 = vmatpush1.msra.mxu0 0.0
    %1865 = vmatprep.subr.mxu0 0.0
    %1866 = vmatpush1.msra.mxu0 0.0
    %1867 = vmatprep.subr.mxu0 0.0
    %1868 = vmatpush1.msra.mxu0 0.0
    %1869 = vmatprep.subr.mxu0 0.0
    %1870 = vmatpush1.msra.mxu0 0.0
    %1871 = vmatprep.subr.mxu0 0.0
    %1872 = vmatpush1.msra.mxu0 0.0
    %1873 = vmatprep.subr.mxu0 0.0
    %1874 = vmatpush1.msra.mxu0 0.0
    %1875 = vmatprep.subr.mxu0 0.0
    %1876 = vmatpush1.msra.mxu0 0.0
    %1877 = vmatprep.subr.mxu0 0.0
    %1878 = vmatpush1.msra.mxu0 0.0
    %1879 = vmatprep.subr.mxu0 0.0
    %1880 = vmatpush1.msra.mxu0 0.0
    %1881 = vmatprep.subr.mxu0 0.0
    %1882 = vmatpush1.msra.mxu0 0.0
    %1883 = vmatprep.subr.mxu0 0.0
    %1884 = vmatpush1.msra.mxu0 0.0
    %1885 = vmatprep.subr.mxu0 0.0
    %1886 = vmatpush1.msra.mxu0 0.0
    %1887 = vmatprep.mubr.f32.mxu0 0.0
    %1888 = vmatmul.mubr.f32.gmra.mrb[0].mxu0 %v1821
    %v1889 = vpop.f32.mrb[0].mxu0
    %v1890 = vadd.f32 0.0, %v1889
    %v1891 = vpop.f32.mrb[0].mxu0
    %1892 = vdwg.mxu0
    %v1894 = vrot.slane %v1890, 6
    %v1896 = vadd.f32 %v1276, %v1894
    %v1897 = vxor.u32 %v1896, 2147483648
    %v1898 = vmul.f32 %v1897, 1.442695
    %v1899 = vpow.pop %v1898
    %v1900 = vadd.f32 %v1899, 1.0
    %v1901 = vrcp.pop %v1900
    %v1902 = vmul.f32 1.0, %v1901
    %v1903 = vtanh.pop %v1896
    %v1905 = vrot.slane %v1809, 6
    %v1907 = vmul.f32 %v1902, %v1905
    %1909 = vrot.lane.b32.xlu0 %v1903, 64
    %v1910 = vpop.permute.xlu0 %1909
    %v1912 = vmul.f32 %v1902, %v1910
    %1914 = vrot.lane.b32.xlu0 %v1912, 32
    %v1915 = vpop.permute.xlu0 %1914
    %v1917 = vadd.f32 %v1907, %v1915
    %v1918 = vtanh.pop %v1917
    %1920 = vrot.lane.b32.xlu0 %v1918, 64
    %v1921 = vpop.permute.xlu0 %1920
    %v1923 = vmul.f32 %v1902, %v1921
    %1925 = vrot.lane.b32.xlu0 %v1923, 32
    %v1926 = vpop.permute.xlu0 %1925
    %1928 = vst.msk [vmem:[#allocation2 + $0x8] sm:$0xc] %vm521, %v1926
    %v1929 = vrot.slane %v1923, 2
    %1930 = vrot.lane.b32.xlu0 %v1929, 32
    %v1931 = vpop.permute.xlu0 %1930
    %v1932 = vsel %vm211, %v1931, 0
    %1934 = vmatprep.subr.mxu0 0.0
    %1935 = vmatpush1.msra.mxu0 %v1279
    %1936 = vmatprep.subr.mxu0 0.0
    %1937 = vmatpush1.msra.mxu0 %v1280
    %1938 = vmatprep.subr.mxu0 0.0
    %1939 = vmatpush1.msra.mxu0 %v1281
    %1940 = vmatprep.subr.mxu0 0.0
    %1941 = vmatpush1.msra.mxu0 %v1282
    %1942 = vmatprep.subr.mxu0 0.0
    %1943 = vmatpush1.msra.mxu0 0.0
    %1944 = vmatprep.subr.mxu0 0.0
    %1945 = vmatpush1.msra.mxu0 0.0
    %1946 = vmatprep.subr.mxu0 0.0
    %1947 = vmatpush1.msra.mxu0 0.0
    %1948 = vmatprep.subr.mxu0 0.0
    %1949 = vmatpush1.msra.mxu0 0.0
    %1950 = vmatprep.subr.mxu0 0.0
    %1951 = vmatpush1.msra.mxu0 0.0
    %1952 = vmatprep.subr.mxu0 0.0
    %1953 = vmatpush1.msra.mxu0 0.0
    %1954 = vmatprep.subr.mxu0 0.0
    %1955 = vmatpush1.msra.mxu0 0.0
    %1956 = vmatprep.subr.mxu0 0.0
    %1957 = vmatpush1.msra.mxu0 0.0
    %1958 = vmatprep.subr.mxu0 0.0
    %1959 = vmatpush1.msra.mxu0 0.0
    %1960 = vmatprep.subr.mxu0 0.0
    %1961 = vmatpush1.msra.mxu0 0.0
    %1962 = vmatprep.subr.mxu0 0.0
    %1963 = vmatpush1.msra.mxu0 0.0
    %1964 = vmatprep.subr.mxu0 0.0
    %1965 = vmatpush1.msra.mxu0 0.0
    %1966 = vmatprep.subr.mxu0 0.0
    %1967 = vmatpush1.msra.mxu0 0.0
    %1968 = vmatprep.subr.mxu0 0.0
    %1969 = vmatpush1.msra.mxu0 0.0
    %1970 = vmatprep.subr.mxu0 0.0
    %1971 = vmatpush1.msra.mxu0 0.0
    %1972 = vmatprep.subr.mxu0 0.0
    %1973 = vmatpush1.msra.mxu0 0.0
    %1974 = vmatprep.subr.mxu0 0.0
    %1975 = vmatpush1.msra.mxu0 0.0
    %1976 = vmatprep.subr.mxu0 0.0
    %1977 = vmatpush1.msra.mxu0 0.0
    %1978 = vmatprep.subr.mxu0 0.0
    %1979 = vmatpush1.msra.mxu0 0.0
    %1980 = vmatprep.subr.mxu0 0.0
    %1981 = vmatpush1.msra.mxu0 0.0
    %1982 = vmatprep.subr.mxu0 0.0
    %1983 = vmatpush1.msra.mxu0 0.0
    %1984 = vmatprep.subr.mxu0 0.0
    %1985 = vmatpush1.msra.mxu0 0.0
    %1986 = vmatprep.subr.mxu0 0.0
    %1987 = vmatpush1.msra.mxu0 0.0
    %1988 = vmatprep.subr.mxu0 0.0
    %1989 = vmatpush1.msra.mxu0 0.0
    %1990 = vmatprep.subr.mxu0 0.0
    %1991 = vmatpush1.msra.mxu0 0.0
    %1992 = vmatprep.subr.mxu0 0.0
    %1993 = vmatpush1.msra.mxu0 0.0
    %1994 = vmatprep.subr.mxu0 0.0
    %1995 = vmatpush1.msra.mxu0 0.0
    %1996 = vmatprep.subr.mxu0 0.0
    %1997 = vmatpush1.msra.mxu0 0.0
    %1998 = vmatprep.mubr.f32.mxu0 0.0
    %1999 = vmatmul.mubr.f32.gmra.mrb[0].mxu0 %v1932
    %v2000 = vpop.f32.mrb[0].mxu0
    %v2001 = vadd.f32 0.0, %v2000
    %v2002 = vpop.f32.mrb[0].mxu0
    %2003 = vdwg.mxu0
    %v2005 = vrot.slane %v2001, 4
    %v2007 = vadd.f32 %v1276, %v2005
    %v2008 = vxor.u32 %v2007, 2147483648
    %v2009 = vmul.f32 %v2008, 1.442695
    %v2010 = vpow.pop %v2009
    %v2011 = vadd.f32 %v2010, 1.0
    %v2012 = vrcp.pop %v2011
    %v2013 = vmul.f32 1.0, %v2012
    %v2014 = vtanh.pop %v2007
    %v2016 = vrot.slane %v1917, 6
    %v2018 = vmul.f32 %v2013, %v2016
    %2020 = vrot.lane.b32.xlu0 %v2014, 64
    %v2021 = vpop.permute.xlu0 %2020
    %v2023 = vmul.f32 %v2013, %v2021
    %2025 = vrot.lane.b32.xlu0 %v2023, 32
    %v2026 = vpop.permute.xlu0 %2025
    %v2028 = vadd.f32 %v2018, %v2026
    %v2029 = vtanh.pop %v2028
    %2031 = vrot.lane.b32.xlu0 %v2029, 64
    %v2032 = vpop.permute.xlu0 %2031
    %v2034 = vmul.f32 %v2013, %v2032
    %2036 = vrot.lane.b32.xlu0 %v2034, 32
    %v2037 = vpop.permute.xlu0 %2036
    %2039 = vst.msk [vmem:[#allocation2 + $0x8] sm:$0x30] %vm633, %v2037
    %v2040 = vrot.slane %v2034, 4
    %2041 = vrot.lane.b32.xlu0 %v2040, 32
    %v2042 = vpop.permute.xlu0 %2041
    %v2043 = vsel %vm211, %v2042, 0
    %2045 = vmatprep.subr.mxu0 0.0
    %2046 = vmatpush1.msra.mxu0 %v1279
    %2047 = vmatprep.subr.mxu0 0.0
    %2048 = vmatpush1.msra.mxu0 %v1280
    %2049 = vmatprep.subr.mxu0 0.0
    %2050 = vmatpush1.msra.mxu0 %v1281
    %2051 = vmatprep.subr.mxu0 0.0
    %2052 = vmatpush1.msra.mxu0 %v1282
    %2053 = vmatprep.subr.mxu0 0.0
    %2054 = vmatpush1.msra.mxu0 0.0
    %2055 = vmatprep.subr.mxu0 0.0
    %2056 = vmatpush1.msra.mxu0 0.0
    %2057 = vmatprep.subr.mxu0 0.0
    %2058 = vmatpush1.msra.mxu0 0.0
    %2059 = vmatprep.subr.mxu0 0.0
    %2060 = vmatpush1.msra.mxu0 0.0
    %2061 = vmatprep.subr.mxu0 0.0
    %2062 = vmatpush1.msra.mxu0 0.0
    %2063 = vmatprep.subr.mxu0 0.0
    %2064 = vmatpush1.msra.mxu0 0.0
    %2065 = vmatprep.subr.mxu0 0.0
    %2066 = vmatpush1.msra.mxu0 0.0
    %2067 = vmatprep.subr.mxu0 0.0
    %2068 = vmatpush1.msra.mxu0 0.0
    %2069 = vmatprep.subr.mxu0 0.0
    %2070 = vmatpush1.msra.mxu0 0.0
    %2071 = vmatprep.subr.mxu0 0.0
    %2072 = vmatpush1.msra.mxu0 0.0
    %2073 = vmatprep.subr.mxu0 0.0
    %2074 = vmatpush1.msra.mxu0 0.0
    %2075 = vmatprep.subr.mxu0 0.0
    %2076 = vmatpush1.msra.mxu0 0.0
    %2077 = vmatprep.subr.mxu0 0.0
    %2078 = vmatpush1.msra.mxu0 0.0
    %2079 = vmatprep.subr.mxu0 0.0
    %2080 = vmatpush1.msra.mxu0 0.0
    %2081 = vmatprep.subr.mxu0 0.0
    %2082 = vmatpush1.msra.mxu0 0.0
    %2083 = vmatprep.subr.mxu0 0.0
    %2084 = vmatpush1.msra.mxu0 0.0
    %2085 = vmatprep.subr.mxu0 0.0
    %2086 = vmatpush1.msra.mxu0 0.0
    %2087 = vmatprep.subr.mxu0 0.0
    %2088 = vmatpush1.msra.mxu0 0.0
    %2089 = vmatprep.subr.mxu0 0.0
    %2090 = vmatpush1.msra.mxu0 0.0
    %2091 = vmatprep.subr.mxu0 0.0
    %2092 = vmatpush1.msra.mxu0 0.0
    %2093 = vmatprep.subr.mxu0 0.0
    %2094 = vmatpush1.msra.mxu0 0.0
    %2095 = vmatprep.subr.mxu0 0.0
    %2096 = vmatpush1.msra.mxu0 0.0
    %2097 = vmatprep.subr.mxu0 0.0
    %2098 = vmatpush1.msra.mxu0 0.0
    %2099 = vmatprep.subr.mxu0 0.0
    %2100 = vmatpush1.msra.mxu0 0.0
    %2101 = vmatprep.subr.mxu0 0.0
    %2102 = vmatpush1.msra.mxu0 0.0
    %2103 = vmatprep.subr.mxu0 0.0
    %2104 = vmatpush1.msra.mxu0 0.0
    %2105 = vmatprep.subr.mxu0 0.0
    %2106 = vmatpush1.msra.mxu0 0.0
    %2107 = vmatprep.subr.mxu0 0.0
    %2108 = vmatpush1.msra.mxu0 0.0
    %2109 = vmatprep.mubr.f32.mxu0 0.0
    %2110 = vmatmul.mubr.f32.gmra.mrb[0].mxu0 %v2043
    %v2111 = vpop.f32.mrb[0].mxu0
    %v2112 = vadd.f32 0.0, %v2111
    %v2113 = vpop.f32.mrb[0].mxu0
    %2114 = vdwg.mxu0
    %v2116 = vrot.slane %v2112, 2
    %v2118 = vadd.f32 %v1276, %v2116
    %v2119 = vxor.u32 %v2118, 2147483648
    %v2120 = vmul.f32 %v2119, 1.442695
    %v2121 = vpow.pop %v2120
    %v2122 = vadd.f32 %v2121, 1.0
    %v2123 = vrcp.pop %v2122
    %v2124 = vmul.f32 1.0, %v2123
    %v2125 = vtanh.pop %v2118
    %v2127 = vrot.slane %v2028, 6
    %v2129 = vmul.f32 %v2124, %v2127
    %2131 = vrot.lane.b32.xlu0 %v2125, 64
    %v2132 = vpop.permute.xlu0 %2131
    %v2134 = vmul.f32 %v2124, %v2132
    %2136 = vrot.lane.b32.xlu0 %v2134, 32
    %v2137 = vpop.permute.xlu0 %2136
    %v2139 = vadd.f32 %v2129, %v2137
    %v2140 = vtanh.pop %v2139
    %2142 = vrot.lane.b32.xlu0 %v2140, 64
    %v2143 = vpop.permute.xlu0 %2142
    %v2145 = vmul.f32 %v2124, %v2143
    %2147 = vrot.lane.b32.xlu0 %v2145, 32
    %v2148 = vpop.permute.xlu0 %2147
    %2150 = vst.msk [vmem:[#allocation2 + $0x8] sm:$0xc0] %vm745, %v2148
    %v2151 = vld [vmem:[#allocation12] sm:$0x1]
    %v2153 = vlaneseq
    %v2154 = vshrl.u32 %v2153, 7
    %v2155 = vsub.s32 0, %v2154
    %v2156 = vrot.slane %v2151, %v2155
    %2157 = vrot.lane.b32.xlu0 %v2156, 96
    %v2158 = vpop.permute.xlu0 %2157
    %v2160 = vmul.f32 %v2145, %v2158
    %2162 = vrot.lane.b32.xlu0 %v2160, 32
    %v2163 = vpop.permute.xlu0 %2162
    %v2165 = vsel %vm745, %v2163, 0.0
    %2166 = vadd.xlane.f32.xlu0 %v2165
    %v2167 = vpop.xlane.xlu0 %2166
    %v2168 = vld [vmem:[#allocation3] sm:$0x1]
    %v2170 = vlaneseq
    %v2171 = vshrl.u32 %v2170, 7
    %v2172 = vsub.s32 0, %v2171
    %v2173 = vrot.slane %v2168, %v2172
    %v2175 = vadd.f32 %v2167, %v2173
    %vm2176 = vcmask 7174
    %2177 = vst.msk [vmem:[%s12 - $0x6] sm:$0xc0] %vm2176, %v2175
    // Predicated region
    $region70: #{day_model_1_forward.1} parent=1 // pred_check
      _
    $region71: #{day_model_1_forward.1} parent=1 // pred_check_branch
      %2179 = sbr.rel (0) target = $region73
    $region72: #{day_model_1_forward.1} parent=1 // pred_region
      _
    $region73: #{day_model_1_forward.1} parent=1 // pred_fallthru
      _
    // Predicated region
    $region74: #{day_model_1_forward.1} parent=1 // pred_check
      _
    $region75: #{day_model_1_forward.1} parent=1 // pred_check_branch
      %2181 = sbr.rel (0) target = $region77
    $region76: #{day_model_1_forward.1} parent=1 // pred_region
      _
    $region77: #{day_model_1_forward.1} parent=1 // pred_fallthru
      _
    // Predicated region
    $region78: #{day_model_1_forward.1} parent=1 // pred_check
      _
    $region79: #{day_model_1_forward.1} parent=1 // pred_check_branch
      %2183 = sbr.rel (0) target = $region81
    $region80: #{day_model_1_forward.1} parent=1 // pred_region
      _
    $region81: #{day_model_1_forward.1} parent=1 // pred_fallthru
      _
    // Predicated region
    $region82: #{day_model_1_forward.1} parent=1 // pred_check
      _
    $region83: #{day_model_1_forward.1} parent=1 // pred_check_branch
      %2185 = sbr.rel (0) target = $region85
    $region84: #{day_model_1_forward.1} parent=1 // pred_region
      _
    $region85: #{day_model_1_forward.1} parent=1 // pred_fallthru
      _
    %2186 = vsyncpa [#allocation5], 1
    %2187 = vsyncpa [#allocation7], 1
    %2188 = vsyncpa [#allocation10], 1
    %2189 = vsyncpa [#allocation13], 1

</llo_original>
